<compile_context>
chip_gen: v6e
topology: v6e:2x2x1
jax: 0.10.0
libtpu: 0.0.40
codegen_flags: <defaults>
</compile_context>

<pallas_src>
import jax
import jax.numpy as jnp
from jax.experimental import pallas as pl
from jax.experimental.pallas import tpu as pltpu

INPUT_SIZE = 1000
OUTPUT_SIZE = 500
K_PADDED = int(pl.cdiv(INPUT_SIZE, 128) * 128)    # 1024 — lane-aligned contraction
N_PADDED = int(pl.cdiv(OUTPUT_SIZE, 128) * 128)   # 512  — lane-dense MXU output


def linear_kernel(x_ref, wt_ref, b_ref, o_ref):
    # x_ref:  [B, K_PADDED]        f32  (cast to bf16 in-kernel for the MXU)
    # wt_ref: [K_PADDED, N_PADDED] bf16 (pre-transposed, zero-padded weight)
    # b_ref:  [1, OUTPUT_SIZE]     f32
    # o_ref:  [B, OUTPUT_SIZE]     f32  (masked tail store, no wrapper slice)
    x_bf16 = x_ref[...].astype(jnp.bfloat16)
    acc = jnp.dot(x_bf16, wt_ref[...], preferred_element_type=jnp.float32)
    o_ref[...] = acc[:, :OUTPUT_SIZE] + b_ref[...]


def prepare_params(weight, bias):
    """One-time layout prep (outside the per-call hot path).

    weight: [N, K] f32 (PyTorch nn.Linear layout: [out_features, in_features])
    bias:   [N]    f32
    Returns:
      wt_bf16: [K_PADDED, N_PADDED] bf16  (transposed, zero-padded, bf16)
      b_2d:    [1, OUTPUT_SIZE]     f32
    """
    N, K = weight.shape
    wt = jnp.transpose(weight)                                        # [K, N]
    wt = jnp.pad(wt, ((0, K_PADDED - K), (0, N_PADDED - N)))          # [Kp, Np]
    wt_bf16 = wt.astype(jnp.bfloat16)
    b_2d = bias.reshape(1, N).astype(jnp.float32)
    return wt_bf16, b_2d


@jax.jit
def small_model_forward(x, wt_bf16, bias_2d):
    """y = x @ weight.T + bias  (PyTorch nn.Linear semantics).

    x:       [B, INPUT_SIZE]          f32
    wt_bf16: [K_PADDED, N_PADDED]     bf16 (from prepare_params)
    bias_2d: [1, OUTPUT_SIZE]         f32  (from prepare_params)
    """
    B, K = x.shape
    Kw, Np = wt_bf16.shape
    assert K == INPUT_SIZE and Kw == K_PADDED and Np == N_PADDED

    # Sublane-align B (zero-cost when B is already a multiple of 8).
    B_pad = int(pl.cdiv(B, 8) * 8)
    if B_pad != B:
        x = jnp.pad(x, ((0, B_pad - B), (0, 0)))
    # Lane-align K; zero-padded weight rows make this numerically inert.
    if K != K_PADDED:
        x = jnp.pad(x, ((0, 0), (0, K_PADDED - K)))

    y = pl.pallas_call(
        linear_kernel,
        out_shape=jax.ShapeDtypeStruct((B_pad, OUTPUT_SIZE), jnp.float32),
        in_specs=[
            pl.BlockSpec(memory_space=pltpu.MemorySpace.VMEM),
            pl.BlockSpec(memory_space=pltpu.MemorySpace.VMEM),
            pl.BlockSpec(memory_space=pltpu.MemorySpace.VMEM),
        ],
        out_specs=pl.BlockSpec(memory_space=pltpu.MemorySpace.VMEM),
        cost_estimate=pl.CostEstimate(
            flops=2 * B_pad * INPUT_SIZE * OUTPUT_SIZE,
            bytes_accessed=(K_PADDED * N_PADDED * 2      # bf16 weight
                            + B_pad * K_PADDED * 4       # x
                            + OUTPUT_SIZE * 4            # bias
                            + B_pad * OUTPUT_SIZE * 4),  # out
            transcendentals=0,
        ),
    )(x, wt_bf16, bias_2d)

    if B_pad != B:
        y = y[:B]
    return y


def init_params(key, input_size, output_size):
    # Deterministic init mimicking torch.nn.Linear default:
    # U(-1/sqrt(in_features), 1/sqrt(in_features)) for both weight and bias.
    kw, kb = jax.random.split(key)
    bound = 1.0 / jnp.sqrt(jnp.float32(input_size))
    weight = jax.random.uniform(
        kw, (output_size, input_size), jnp.float32, -bound, bound)
    bias = jax.random.uniform(
        kb, (output_size,), jnp.float32, -bound, bound)
    return weight, bias


if __name__ == "__main__":
    key = jax.random.PRNGKey(0)
    k_x, k_p = jax.random.split(key)

    B = 8
    x = jax.random.normal(k_x, (B, INPUT_SIZE), jnp.float32)
    weight, bias = init_params(k_p, INPUT_SIZE, OUTPUT_SIZE)

    # One-time parameter prep (transpose + pad + bf16 cast), then the kernel.
    wt_bf16, bias_2d = prepare_params(weight, bias)
    y = small_model_forward(x, wt_bf16, bias_2d)
    y = jax.block_until_ready(y)
    assert y.shape == (B, OUTPUT_SIZE)

    # Tight check vs. a bf16-consistent reference (same casts, f32 accumulate).
    y_ref_bf16 = (
        jnp.dot(x.astype(jnp.bfloat16), wt_bf16[:INPUT_SIZE, :OUTPUT_SIZE],
                preferred_element_type=jnp.float32)
        + bias
    )
    assert jnp.allclose(y, y_ref_bf16, atol=2e-3, rtol=2e-3)

    # Sanity check vs. full-f32 nn.Linear semantics (loose: bf16 weight rounding).
    y_ref_f32 = x @ weight.T + bias
    assert jnp.allclose(y, y_ref_f32, atol=5e-2, rtol=5e-2)

    print("KERNEL_OK")
</pallas_src>

<mosaic_0001>
module attributes {stable_mosaic.version = 11 : i64} {
  func.func @linear_kernel(%arg0: memref<8x1024xf32, #tpu.memory_space<vmem>>, %arg1: memref<1024x512xbf16, #tpu.memory_space<vmem>>, %arg2: memref<1x500xf32, #tpu.memory_space<vmem>>, %arg3: memref<8x500xf32, #tpu.memory_space<vmem>>) attributes {dimension_semantics = [], scalar_prefetch = 0 : i64, scratch_operands = 0 : i64, tpu.core_type = #tpu.core_type<tc>} {
    %c0 = arith.constant 0 : index
    %c0_0 = arith.constant 0 : index
    %0 = vector.load %arg0[%c0, %c0_0] : memref<8x1024xf32, #tpu.memory_space<vmem>>, vector<8x1024xf32>
    %1 = arith.truncf %0 : vector<8x1024xf32> to vector<8x1024xbf16>
    %c0_1 = arith.constant 0 : index
    %c0_2 = arith.constant 0 : index
    %2 = vector.load %arg1[%c0_1, %c0_2] : memref<1024x512xbf16, #tpu.memory_space<vmem>>, vector<1024x512xbf16>
    %cst = arith.constant dense<0.000000e+00> : vector<8x512xf32>
    %3 = tpu.matmul %1, %2, %cst {dimension_numbers = #tpu.dot_dimension_numbers<[1], [0], [0], [1], [0, 0, 1, 1], [], []>} : vector<8x1024xbf16>, vector<1024x512xbf16>, vector<8x512xf32> -> vector<8x512xf32>
    %4 = vector.extract_strided_slice %3 {offsets = [0, 0], sizes = [8, 500], strides = [1, 1]} : vector<8x512xf32> to vector<8x500xf32>
    %c0_3 = arith.constant 0 : index
    %c0_4 = arith.constant 0 : index
    %5 = vector.load %arg2[%c0_3, %c0_4] : memref<1x500xf32, #tpu.memory_space<vmem>>, vector<1x500xf32>
    %6 = vector.broadcast %5 : vector<1x500xf32> to vector<8x500xf32>
    %7 = arith.addf %4, %6 : vector<8x500xf32>
    %c0_5 = arith.constant 0 : index
    %c0_6 = arith.constant 0 : index
    %8 = vector.load %arg3[%c0_5, %c0_6] : memref<8x500xf32, #tpu.memory_space<vmem>>, vector<8x500xf32>
    tpu.vector_store %arg3[%c0_5, %c0_6], %7 {strides = array<i32>} : memref<8x500xf32, #tpu.memory_space<vmem>>, vector<8x500xf32>,
    return
  }
}

</mosaic_0001>

<llo_original>
// kernel: small_model_forward.1
$region0: #{small_model_forward.1}
  #allocation0 [shape = 'u32[]', space=smem, size = 0x4, offset = 0x4, fixed_abs, tag = 'smem constant byte address 0x4 - core index']
  #allocation1 [shape = 'u32[144,128]{1,0:T(1,128)}', space=vmem, size = 0x12000, scoped, tag = 'internal scratch']
  %s0 = inlined_call_operand.vmem [shape: f32[8,1024], index: 0, kind: input, shape index: {}]
  %s1 = inlined_call_operand.hbm [shape: bf16[1024,512], index: 1, kind: input, shape index: {}]
  %s2 = inlined_call_operand.vmem [shape: f32[1,500], index: 2, kind: input, shape index: {}]
  %s3 = inlined_call_operand.hbm [shape: f32[8,500], index: 3, kind: output, shape index: {}]
  %s4 = sld [smem:[#allocation0]]
  $region26: #{small_model_forward.1} parent=0
    _
  %s6 = ssub.s32 1, %s4
  %s7 = scalar_select 0, %s6, %s4
  $region1: #{small_model_forward.1} parent=0
    #allocation2 [shape = 'u8[1048576]{0}', space=vmem, size = 0x100000, scoped, tag = 'input window, operand 1, single buffered']
    #allocation3 [shape = 's32[1]{0}', space=sflag, size = 0x4, scoped, tag = 'scoped memory for small_model_forward.1']
    #allocation4 [shape = 's32[1]{0}', space=sflag, size = 0x4, scoped, tag = 'scoped memory for small_model_forward.1']
    #allocation5 [shape = 'u8[16384]{0}', space=vmem, size = 0x4000, scoped, tag = 'output window, operand 0, single buffered']
    %8 = vsyncpa [#allocation3], 0
    %9 = vsyncpa [#allocation4], 0
    // Predicated region
    $region2: #{small_model_forward.1} parent=1 // pred_check
      _
    $region3: #{small_model_forward.1} parent=1 // pred_check_branch
      %11 = sbr.rel (0) target = $region5
    $region4: #{small_model_forward.1} parent=1 // pred_region
      _
    $region5: #{small_model_forward.1} parent=1 // pred_fallthru
      _
    // Predicated region
    $region6: #{small_model_forward.1} parent=1 // pred_check
      _
    $region7: #{small_model_forward.1} parent=1 // pred_check_branch
      %13 = sbr.rel (0) target = $region9
    $region8: #{small_model_forward.1} parent=1 // pred_region
      %s15 = ssub.s32 32768, 32768
      %16 = vsyncadd [#allocation3], %s15
      %s17 = sshll.u32 [#allocation2], 4
      %s18 = int_to_ptr.vmem [resolvable:$true] %s17
      %23 = dma.hbm_to_vmem [thread:$0]  %s1, 32768, %s18, [#allocation3], 256, 256, 16
    $region9: #{small_model_forward.1} parent=1 // pred_fallthru
      _
    // Predicated region
    $region10: #{small_model_forward.1} parent=1 // pred_check
      _
    $region11: #{small_model_forward.1} parent=1 // pred_check_branch
      %25 = sbr.rel (0) target = $region13
    $region12: #{small_model_forward.1} parent=1 // pred_region
      _
    $region13: #{small_model_forward.1} parent=1 // pred_fallthru
      _
    // Predicated region
    $region14: #{small_model_forward.1} parent=1 // pred_check
      _
    $region15: #{small_model_forward.1} parent=1 // pred_check_branch
      %27 = sbr.rel (0) target = $region17
    $region16: #{small_model_forward.1} parent=1 // pred_region
      %28 = dma.done [#allocation3], 32768
    $region17: #{small_model_forward.1} parent=1 // pred_fallthru
      _
    %v29 = vld [vmem:[%s0] sm:$0xff]
    %v30 = vld [vmem:[%s0 + $0x8] sm:$0xff]
    %v31 = vld [vmem:[%s0 + $0x10] sm:$0xff]
    %v32 = vld [vmem:[%s0 + $0x18] sm:$0xff]
    %v33 = vld [vmem:[%s0 + $0x20] sm:$0xff]
    %v34 = vld [vmem:[%s0 + $0x28] sm:$0xff]
    %v35 = vld [vmem:[%s0 + $0x30] sm:$0xff]
    %v36 = vld [vmem:[%s0 + $0x38] sm:$0xff]
    %v37 = vpack.c.bf16 %v29, %v29
    %v38 = vpack.c.bf16 %v30, %v30
    %v39 = vpack.c.bf16 %v31, %v31
    %v40 = vpack.c.bf16 %v32, %v32
    %v41 = vpack.c.bf16 %v33, %v33
    %v42 = vpack.c.bf16 %v34, %v34
    %v43 = vpack.c.bf16 %v35, %v35
    %v44 = vpack.c.bf16 %v36, %v36
    %v45 = vld [vmem:[#allocation2] sm:$0xff]
    %v46 = vld [vmem:[#allocation2 + $0x8] sm:$0xff]
    %v47 = vld [vmem:[#allocation2 + $0x10] sm:$0xff]
    %v48 = vld [vmem:[#allocation2 + $0x18] sm:$0xff]
    %v49 = vld [vmem:[#allocation2 + $0x20] sm:$0xff]
    %v50 = vld [vmem:[#allocation2 + $0x28] sm:$0xff]
    %v51 = vld [vmem:[#allocation2 + $0x30] sm:$0xff]
    %v52 = vld [vmem:[#allocation2 + $0x38] sm:$0xff]
    %v53 = vld [vmem:[#allocation2 + $0x40] sm:$0xff]
    %v54 = vld [vmem:[#allocation2 + $0x48] sm:$0xff]
    %v55 = vld [vmem:[#allocation2 + $0x50] sm:$0xff]
    %v56 = vld [vmem:[#allocation2 + $0x58] sm:$0xff]
    %v57 = vld [vmem:[#allocation2 + $0x60] sm:$0xff]
    %v58 = vld [vmem:[#allocation2 + $0x68] sm:$0xff]
    %v59 = vld [vmem:[#allocation2 + $0x70] sm:$0xff]
    %v60 = vld [vmem:[#allocation2 + $0x78] sm:$0xff]
    %v61 = vld [vmem:[#allocation2 + $0x80] sm:$0xff]
    %v62 = vld [vmem:[#allocation2 + $0x88] sm:$0xff]
    %v63 = vld [vmem:[#allocation2 + $0x90] sm:$0xff]
    %v64 = vld [vmem:[#allocation2 + $0x98] sm:$0xff]
    %v65 = vld [vmem:[#allocation2 + $0xa0] sm:$0xff]
    %v66 = vld [vmem:[#allocation2 + $0xa8] sm:$0xff]
    %v67 = vld [vmem:[#allocation2 + $0xb0] sm:$0xff]
    %v68 = vld [vmem:[#allocation2 + $0xb8] sm:$0xff]
    %v69 = vld [vmem:[#allocation2 + $0xc0] sm:$0xff]
    %v70 = vld [vmem:[#allocation2 + $0xc8] sm:$0xff]
    %v71 = vld [vmem:[#allocation2 + $0xd0] sm:$0xff]
    %v72 = vld [vmem:[#allocation2 + $0xd8] sm:$0xff]
    %v73 = vld [vmem:[#allocation2 + $0xe0] sm:$0xff]
    %v74 = vld [vmem:[#allocation2 + $0xe8] sm:$0xff]
    %v75 = vld [vmem:[#allocation2 + $0xf0] sm:$0xff]
    %v76 = vld [vmem:[#allocation2 + $0xf8] sm:$0xff]
    %v77 = vld [vmem:[#allocation2 + $0x100] sm:$0xff]
    %v78 = vld [vmem:[#allocation2 + $0x108] sm:$0xff]
    %v79 = vld [vmem:[#allocation2 + $0x110] sm:$0xff]
    %v80 = vld [vmem:[#allocation2 + $0x118] sm:$0xff]
    %v81 = vld [vmem:[#allocation2 + $0x120] sm:$0xff]
    %v82 = vld [vmem:[#allocation2 + $0x128] sm:$0xff]
    %v83 = vld [vmem:[#allocation2 + $0x130] sm:$0xff]
    %v84 = vld [vmem:[#allocation2 + $0x138] sm:$0xff]
    %v85 = vld [vmem:[#allocation2 + $0x140] sm:$0xff]
    %v86 = vld [vmem:[#allocation2 + $0x148] sm:$0xff]
    %v87 = vld [vmem:[#allocation2 + $0x150] sm:$0xff]
    %v88 = vld [vmem:[#allocation2 + $0x158] sm:$0xff]
    %v89 = vld [vmem:[#allocation2 + $0x160] sm:$0xff]
    %v90 = vld [vmem:[#allocation2 + $0x168] sm:$0xff]
    %v91 = vld [vmem:[#allocation2 + $0x170] sm:$0xff]
    %v92 = vld [vmem:[#allocation2 + $0x178] sm:$0xff]
    %v93 = vld [vmem:[#allocation2 + $0x180] sm:$0xff]
    %v94 = vld [vmem:[#allocation2 + $0x188] sm:$0xff]
    %v95 = vld [vmem:[#allocation2 + $0x190] sm:$0xff]
    %v96 = vld [vmem:[#allocation2 + $0x198] sm:$0xff]
    %v97 = vld [vmem:[#allocation2 + $0x1a0] sm:$0xff]
    %v98 = vld [vmem:[#allocation2 + $0x1a8] sm:$0xff]
    %v99 = vld [vmem:[#allocation2 + $0x1b0] sm:$0xff]
    %v100 = vld [vmem:[#allocation2 + $0x1b8] sm:$0xff]
    %v101 = vld [vmem:[#allocation2 + $0x1c0] sm:$0xff]
    %v102 = vld [vmem:[#allocation2 + $0x1c8] sm:$0xff]
    %v103 = vld [vmem:[#allocation2 + $0x1d0] sm:$0xff]
    %v104 = vld [vmem:[#allocation2 + $0x1d8] sm:$0xff]
    %v105 = vld [vmem:[#allocation2 + $0x1e0] sm:$0xff]
    %v106 = vld [vmem:[#allocation2 + $0x1e8] sm:$0xff]
    %v107 = vld [vmem:[#allocation2 + $0x1f0] sm:$0xff]
    %v108 = vld [vmem:[#allocation2 + $0x1f8] sm:$0xff]
    %v109 = vld [vmem:[#allocation2 + $0x200] sm:$0xff]
    %v110 = vld [vmem:[#allocation2 + $0x208] sm:$0xff]
    %v111 = vld [vmem:[#allocation2 + $0x210] sm:$0xff]
    %v112 = vld [vmem:[#allocation2 + $0x218] sm:$0xff]
    %v113 = vld [vmem:[#allocation2 + $0x220] sm:$0xff]
    %v114 = vld [vmem:[#allocation2 + $0x228] sm:$0xff]
    %v115 = vld [vmem:[#allocation2 + $0x230] sm:$0xff]
    %v116 = vld [vmem:[#allocation2 + $0x238] sm:$0xff]
    %v117 = vld [vmem:[#allocation2 + $0x240] sm:$0xff]
    %v118 = vld [vmem:[#allocation2 + $0x248] sm:$0xff]
    %v119 = vld [vmem:[#allocation2 + $0x250] sm:$0xff]
    %v120 = vld [vmem:[#allocation2 + $0x258] sm:$0xff]
    %v121 = vld [vmem:[#allocation2 + $0x260] sm:$0xff]
    %v122 = vld [vmem:[#allocation2 + $0x268] sm:$0xff]
    %v123 = vld [vmem:[#allocation2 + $0x270] sm:$0xff]
    %v124 = vld [vmem:[#allocation2 + $0x278] sm:$0xff]
    %v125 = vld [vmem:[#allocation2 + $0x280] sm:$0xff]
    %v126 = vld [vmem:[#allocation2 + $0x288] sm:$0xff]
    %v127 = vld [vmem:[#allocation2 + $0x290] sm:$0xff]
    %v128 = vld [vmem:[#allocation2 + $0x298] sm:$0xff]
    %v129 = vld [vmem:[#allocation2 + $0x2a0] sm:$0xff]
    %v130 = vld [vmem:[#allocation2 + $0x2a8] sm:$0xff]
    %v131 = vld [vmem:[#allocation2 + $0x2b0] sm:$0xff]
    %v132 = vld [vmem:[#allocation2 + $0x2b8] sm:$0xff]
    %v133 = vld [vmem:[#allocation2 + $0x2c0] sm:$0xff]
    %v134 = vld [vmem:[#allocation2 + $0x2c8] sm:$0xff]
    %v135 = vld [vmem:[#allocation2 + $0x2d0] sm:$0xff]
    %v136 = vld [vmem:[#allocation2 + $0x2d8] sm:$0xff]
    %v137 = vld [vmem:[#allocation2 + $0x2e0] sm:$0xff]
    %v138 = vld [vmem:[#allocation2 + $0x2e8] sm:$0xff]
    %v139 = vld [vmem:[#allocation2 + $0x2f0] sm:$0xff]
    %v140 = vld [vmem:[#allocation2 + $0x2f8] sm:$0xff]
    %v141 = vld [vmem:[#allocation2 + $0x300] sm:$0xff]
    %v142 = vld [vmem:[#allocation2 + $0x308] sm:$0xff]
    %v143 = vld [vmem:[#allocation2 + $0x310] sm:$0xff]
    %v144 = vld [vmem:[#allocation2 + $0x318] sm:$0xff]
    %v145 = vld [vmem:[#allocation2 + $0x320] sm:$0xff]
    %v146 = vld [vmem:[#allocation2 + $0x328] sm:$0xff]
    %v147 = vld [vmem:[#allocation2 + $0x330] sm:$0xff]
    %v148 = vld [vmem:[#allocation2 + $0x338] sm:$0xff]
    %v149 = vld [vmem:[#allocation2 + $0x340] sm:$0xff]
    %v150 = vld [vmem:[#allocation2 + $0x348] sm:$0xff]
    %v151 = vld [vmem:[#allocation2 + $0x350] sm:$0xff]
    %v152 = vld [vmem:[#allocation2 + $0x358] sm:$0xff]
    %v153 = vld [vmem:[#allocation2 + $0x360] sm:$0xff]
    %v154 = vld [vmem:[#allocation2 + $0x368] sm:$0xff]
    %v155 = vld [vmem:[#allocation2 + $0x370] sm:$0xff]
    %v156 = vld [vmem:[#allocation2 + $0x378] sm:$0xff]
    %v157 = vld [vmem:[#allocation2 + $0x380] sm:$0xff]
    %v158 = vld [vmem:[#allocation2 + $0x388] sm:$0xff]
    %v159 = vld [vmem:[#allocation2 + $0x390] sm:$0xff]
    %v160 = vld [vmem:[#allocation2 + $0x398] sm:$0xff]
    %v161 = vld [vmem:[#allocation2 + $0x3a0] sm:$0xff]
    %v162 = vld [vmem:[#allocation2 + $0x3a8] sm:$0xff]
    %v163 = vld [vmem:[#allocation2 + $0x3b0] sm:$0xff]
    %v164 = vld [vmem:[#allocation2 + $0x3b8] sm:$0xff]
    %v165 = vld [vmem:[#allocation2 + $0x3c0] sm:$0xff]
    %v166 = vld [vmem:[#allocation2 + $0x3c8] sm:$0xff]
    %v167 = vld [vmem:[#allocation2 + $0x3d0] sm:$0xff]
    %v168 = vld [vmem:[#allocation2 + $0x3d8] sm:$0xff]
    %v169 = vld [vmem:[#allocation2 + $0x3e0] sm:$0xff]
    %v170 = vld [vmem:[#allocation2 + $0x3e8] sm:$0xff]
    %v171 = vld [vmem:[#allocation2 + $0x3f0] sm:$0xff]
    %v172 = vld [vmem:[#allocation2 + $0x3f8] sm:$0xff]
    %v173 = vld [vmem:[#allocation2 + $0x400] sm:$0xff]
    %v174 = vld [vmem:[#allocation2 + $0x408] sm:$0xff]
    %v175 = vld [vmem:[#allocation2 + $0x410] sm:$0xff]
    %v176 = vld [vmem:[#allocation2 + $0x418] sm:$0xff]
    %v177 = vld [vmem:[#allocation2 + $0x420] sm:$0xff]
    %v178 = vld [vmem:[#allocation2 + $0x428] sm:$0xff]
    %v179 = vld [vmem:[#allocation2 + $0x430] sm:$0xff]
    %v180 = vld [vmem:[#allocation2 + $0x438] sm:$0xff]
    %v181 = vld [vmem:[#allocation2 + $0x440] sm:$0xff]
    %v182 = vld [vmem:[#allocation2 + $0x448] sm:$0xff]
    %v183 = vld [vmem:[#allocation2 + $0x450] sm:$0xff]
    %v184 = vld [vmem:[#allocation2 + $0x458] sm:$0xff]
    %v185 = vld [vmem:[#allocation2 + $0x460] sm:$0xff]
    %v186 = vld [vmem:[#allocation2 + $0x468] sm:$0xff]
    %v187 = vld [vmem:[#allocation2 + $0x470] sm:$0xff]
    %v188 = vld [vmem:[#allocation2 + $0x478] sm:$0xff]
    %v189 = vld [vmem:[#allocation2 + $0x480] sm:$0xff]
    %v190 = vld [vmem:[#allocation2 + $0x488] sm:$0xff]
    %v191 = vld [vmem:[#allocation2 + $0x490] sm:$0xff]
    %v192 = vld [vmem:[#allocation2 + $0x498] sm:$0xff]
    %v193 = vld [vmem:[#allocation2 + $0x4a0] sm:$0xff]
    %v194 = vld [vmem:[#allocation2 + $0x4a8] sm:$0xff]
    %v195 = vld [vmem:[#allocation2 + $0x4b0] sm:$0xff]
    %v196 = vld [vmem:[#allocation2 + $0x4b8] sm:$0xff]
    %v197 = vld [vmem:[#allocation2 + $0x4c0] sm:$0xff]
    %v198 = vld [vmem:[#allocation2 + $0x4c8] sm:$0xff]
    %v199 = vld [vmem:[#allocation2 + $0x4d0] sm:$0xff]
    %v200 = vld [vmem:[#allocation2 + $0x4d8] sm:$0xff]
    %v201 = vld [vmem:[#allocation2 + $0x4e0] sm:$0xff]
    %v202 = vld [vmem:[#allocation2 + $0x4e8] sm:$0xff]
    %v203 = vld [vmem:[#allocation2 + $0x4f0] sm:$0xff]
    %v204 = vld [vmem:[#allocation2 + $0x4f8] sm:$0xff]
    %v205 = vld [vmem:[#allocation2 + $0x500] sm:$0xff]
    %v206 = vld [vmem:[#allocation2 + $0x508] sm:$0xff]
    %v207 = vld [vmem:[#allocation2 + $0x510] sm:$0xff]
    %v208 = vld [vmem:[#allocation2 + $0x518] sm:$0xff]
    %v209 = vld [vmem:[#allocation2 + $0x520] sm:$0xff]
    %v210 = vld [vmem:[#allocation2 + $0x528] sm:$0xff]
    %v211 = vld [vmem:[#allocation2 + $0x530] sm:$0xff]
    %v212 = vld [vmem:[#allocation2 + $0x538] sm:$0xff]
    %v213 = vld [vmem:[#allocation2 + $0x540] sm:$0xff]
    %v214 = vld [vmem:[#allocation2 + $0x548] sm:$0xff]
    %v215 = vld [vmem:[#allocation2 + $0x550] sm:$0xff]
    %v216 = vld [vmem:[#allocation2 + $0x558] sm:$0xff]
    %v217 = vld [vmem:[#allocation2 + $0x560] sm:$0xff]
    %v218 = vld [vmem:[#allocation2 + $0x568] sm:$0xff]
    %v219 = vld [vmem:[#allocation2 + $0x570] sm:$0xff]
    %v220 = vld [vmem:[#allocation2 + $0x578] sm:$0xff]
    %v221 = vld [vmem:[#allocation2 + $0x580] sm:$0xff]
    %v222 = vld [vmem:[#allocation2 + $0x588] sm:$0xff]
    %v223 = vld [vmem:[#allocation2 + $0x590] sm:$0xff]
    %v224 = vld [vmem:[#allocation2 + $0x598] sm:$0xff]
    %v225 = vld [vmem:[#allocation2 + $0x5a0] sm:$0xff]
    %v226 = vld [vmem:[#allocation2 + $0x5a8] sm:$0xff]
    %v227 = vld [vmem:[#allocation2 + $0x5b0] sm:$0xff]
    %v228 = vld [vmem:[#allocation2 + $0x5b8] sm:$0xff]
    %v229 = vld [vmem:[#allocation2 + $0x5c0] sm:$0xff]
    %v230 = vld [vmem:[#allocation2 + $0x5c8] sm:$0xff]
    %v231 = vld [vmem:[#allocation2 + $0x5d0] sm:$0xff]
    %v232 = vld [vmem:[#allocation2 + $0x5d8] sm:$0xff]
    %v233 = vld [vmem:[#allocation2 + $0x5e0] sm:$0xff]
    %v234 = vld [vmem:[#allocation2 + $0x5e8] sm:$0xff]
    %v235 = vld [vmem:[#allocation2 + $0x5f0] sm:$0xff]
    %v236 = vld [vmem:[#allocation2 + $0x5f8] sm:$0xff]
    %v237 = vld [vmem:[#allocation2 + $0x600] sm:$0xff]
    %v238 = vld [vmem:[#allocation2 + $0x608] sm:$0xff]
    %v239 = vld [vmem:[#allocation2 + $0x610] sm:$0xff]
    %v240 = vld [vmem:[#allocation2 + $0x618] sm:$0xff]
    %v241 = vld [vmem:[#allocation2 + $0x620] sm:$0xff]
    %v242 = vld [vmem:[#allocation2 + $0x628] sm:$0xff]
    %v243 = vld [vmem:[#allocation2 + $0x630] sm:$0xff]
    %v244 = vld [vmem:[#allocation2 + $0x638] sm:$0xff]
    %v245 = vld [vmem:[#allocation2 + $0x640] sm:$0xff]
    %v246 = vld [vmem:[#allocation2 + $0x648] sm:$0xff]
    %v247 = vld [vmem:[#allocation2 + $0x650] sm:$0xff]
    %v248 = vld [vmem:[#allocation2 + $0x658] sm:$0xff]
    %v249 = vld [vmem:[#allocation2 + $0x660] sm:$0xff]
    %v250 = vld [vmem:[#allocation2 + $0x668] sm:$0xff]
    %v251 = vld [vmem:[#allocation2 + $0x670] sm:$0xff]
    %v252 = vld [vmem:[#allocation2 + $0x678] sm:$0xff]
    %v253 = vld [vmem:[#allocation2 + $0x680] sm:$0xff]
    %v254 = vld [vmem:[#allocation2 + $0x688] sm:$0xff]
    %v255 = vld [vmem:[#allocation2 + $0x690] sm:$0xff]
    %v256 = vld [vmem:[#allocation2 + $0x698] sm:$0xff]
    %v257 = vld [vmem:[#allocation2 + $0x6a0] sm:$0xff]
    %v258 = vld [vmem:[#allocation2 + $0x6a8] sm:$0xff]
    %v259 = vld [vmem:[#allocation2 + $0x6b0] sm:$0xff]
    %v260 = vld [vmem:[#allocation2 + $0x6b8] sm:$0xff]
    %v261 = vld [vmem:[#allocation2 + $0x6c0] sm:$0xff]
    %v262 = vld [vmem:[#allocation2 + $0x6c8] sm:$0xff]
    %v263 = vld [vmem:[#allocation2 + $0x6d0] sm:$0xff]
    %v264 = vld [vmem:[#allocation2 + $0x6d8] sm:$0xff]
    %v265 = vld [vmem:[#allocation2 + $0x6e0] sm:$0xff]
    %v266 = vld [vmem:[#allocation2 + $0x6e8] sm:$0xff]
    %v267 = vld [vmem:[#allocation2 + $0x6f0] sm:$0xff]
    %v268 = vld [vmem:[#allocation2 + $0x6f8] sm:$0xff]
    %v269 = vld [vmem:[#allocation2 + $0x700] sm:$0xff]
    %v270 = vld [vmem:[#allocation2 + $0x708] sm:$0xff]
    %v271 = vld [vmem:[#allocation2 + $0x710] sm:$0xff]
    %v272 = vld [vmem:[#allocation2 + $0x718] sm:$0xff]
    %v273 = vld [vmem:[#allocation2 + $0x720] sm:$0xff]
    %v274 = vld [vmem:[#allocation2 + $0x728] sm:$0xff]
    %v275 = vld [vmem:[#allocation2 + $0x730] sm:$0xff]
    %v276 = vld [vmem:[#allocation2 + $0x738] sm:$0xff]
    %v277 = vld [vmem:[#allocation2 + $0x740] sm:$0xff]
    %v278 = vld [vmem:[#allocation2 + $0x748] sm:$0xff]
    %v279 = vld [vmem:[#allocation2 + $0x750] sm:$0xff]
    %v280 = vld [vmem:[#allocation2 + $0x758] sm:$0xff]
    %v281 = vld [vmem:[#allocation2 + $0x760] sm:$0xff]
    %v282 = vld [vmem:[#allocation2 + $0x768] sm:$0xff]
    %v283 = vld [vmem:[#allocation2 + $0x770] sm:$0xff]
    %v284 = vld [vmem:[#allocation2 + $0x778] sm:$0xff]
    %v285 = vld [vmem:[#allocation2 + $0x780] sm:$0xff]
    %v286 = vld [vmem:[#allocation2 + $0x788] sm:$0xff]
    %v287 = vld [vmem:[#allocation2 + $0x790] sm:$0xff]
    %v288 = vld [vmem:[#allocation2 + $0x798] sm:$0xff]
    %v289 = vld [vmem:[#allocation2 + $0x7a0] sm:$0xff]
    %v290 = vld [vmem:[#allocation2 + $0x7a8] sm:$0xff]
    %v291 = vld [vmem:[#allocation2 + $0x7b0] sm:$0xff]
    %v292 = vld [vmem:[#allocation2 + $0x7b8] sm:$0xff]
    %v293 = vld [vmem:[#allocation2 + $0x7c0] sm:$0xff]
    %v294 = vld [vmem:[#allocation2 + $0x7c8] sm:$0xff]
    %v295 = vld [vmem:[#allocation2 + $0x7d0] sm:$0xff]
    %v296 = vld [vmem:[#allocation2 + $0x7d8] sm:$0xff]
    %v297 = vld [vmem:[#allocation2 + $0x7e0] sm:$0xff]
    %v298 = vld [vmem:[#allocation2 + $0x7e8] sm:$0xff]
    %v299 = vld [vmem:[#allocation2 + $0x7f0] sm:$0xff]
    %v300 = vld [vmem:[#allocation2 + $0x7f8] sm:$0xff]
    %v557 = vunpack.c.l.b16 %v45
    %v558 = vunpack.c.h.b16 %v45
    %v559 = vunpack.c.l.b16 %v46
    %v560 = vunpack.c.h.b16 %v46
    %v561 = vunpack.c.l.b16 %v47
    %v562 = vunpack.c.h.b16 %v47
    %v563 = vunpack.c.l.b16 %v48
    %v564 = vunpack.c.h.b16 %v48
    %v565 = vunpack.c.l.b16 %v49
    %v566 = vunpack.c.h.b16 %v49
    %v567 = vunpack.c.l.b16 %v50
    %v568 = vunpack.c.h.b16 %v50
    %v569 = vunpack.c.l.b16 %v51
    %v570 = vunpack.c.h.b16 %v51
    %v571 = vunpack.c.l.b16 %v52
    %v572 = vunpack.c.h.b16 %v52
    %v573 = vunpack.c.l.b16 %v53
    %v574 = vunpack.c.h.b16 %v53
    %v575 = vunpack.c.l.b16 %v54
    %v576 = vunpack.c.h.b16 %v54
    %v577 = vunpack.c.l.b16 %v55
    %v578 = vunpack.c.h.b16 %v55
    %v579 = vunpack.c.l.b16 %v56
    %v580 = vunpack.c.h.b16 %v56
    %v581 = vunpack.c.l.b16 %v57
    %v582 = vunpack.c.h.b16 %v57
    %v583 = vunpack.c.l.b16 %v58
    %v584 = vunpack.c.h.b16 %v58
    %v585 = vunpack.c.l.b16 %v59
    %v586 = vunpack.c.h.b16 %v59
    %v587 = vunpack.c.l.b16 %v60
    %v588 = vunpack.c.h.b16 %v60
    %v589 = vunpack.c.l.b16 %v61
    %v590 = vunpack.c.h.b16 %v61
    %v591 = vunpack.c.l.b16 %v62
    %v592 = vunpack.c.h.b16 %v62
    %v593 = vunpack.c.l.b16 %v63
    %v594 = vunpack.c.h.b16 %v63
    %v595 = vunpack.c.l.b16 %v64
    %v596 = vunpack.c.h.b16 %v64
    %v597 = vunpack.c.l.b16 %v65
    %v598 = vunpack.c.h.b16 %v65
    %v599 = vunpack.c.l.b16 %v66
    %v600 = vunpack.c.h.b16 %v66
    %v601 = vunpack.c.l.b16 %v67
    %v602 = vunpack.c.h.b16 %v67
    %v603 = vunpack.c.l.b16 %v68
    %v604 = vunpack.c.h.b16 %v68
    %v605 = vunpack.c.l.b16 %v69
    %v606 = vunpack.c.h.b16 %v69
    %v607 = vunpack.c.l.b16 %v70
    %v608 = vunpack.c.h.b16 %v70
    %v609 = vunpack.c.l.b16 %v71
    %v610 = vunpack.c.h.b16 %v71
    %v611 = vunpack.c.l.b16 %v72
    %v612 = vunpack.c.h.b16 %v72
    %v613 = vunpack.c.l.b16 %v73
    %v614 = vunpack.c.h.b16 %v73
    %v615 = vunpack.c.l.b16 %v74
    %v616 = vunpack.c.h.b16 %v74
    %v617 = vunpack.c.l.b16 %v75
    %v618 = vunpack.c.h.b16 %v75
    %v619 = vunpack.c.l.b16 %v76
    %v620 = vunpack.c.h.b16 %v76
    %v621 = vunpack.c.l.b16 %v77
    %v622 = vunpack.c.h.b16 %v77
    %v623 = vunpack.c.l.b16 %v78
    %v624 = vunpack.c.h.b16 %v78
    %v625 = vunpack.c.l.b16 %v79
    %v626 = vunpack.c.h.b16 %v79
    %v627 = vunpack.c.l.b16 %v80
    %v628 = vunpack.c.h.b16 %v80
    %v629 = vunpack.c.l.b16 %v81
    %v630 = vunpack.c.h.b16 %v81
    %v631 = vunpack.c.l.b16 %v82
    %v632 = vunpack.c.h.b16 %v82
    %v633 = vunpack.c.l.b16 %v83
    %v634 = vunpack.c.h.b16 %v83
    %v635 = vunpack.c.l.b16 %v84
    %v636 = vunpack.c.h.b16 %v84
    %v637 = vunpack.c.l.b16 %v85
    %v638 = vunpack.c.h.b16 %v85
    %v639 = vunpack.c.l.b16 %v86
    %v640 = vunpack.c.h.b16 %v86
    %v641 = vunpack.c.l.b16 %v87
    %v642 = vunpack.c.h.b16 %v87
    %v643 = vunpack.c.l.b16 %v88
    %v644 = vunpack.c.h.b16 %v88
    %v645 = vunpack.c.l.b16 %v89
    %v646 = vunpack.c.h.b16 %v89
    %v647 = vunpack.c.l.b16 %v90
    %v648 = vunpack.c.h.b16 %v90
    %v649 = vunpack.c.l.b16 %v91
    %v650 = vunpack.c.h.b16 %v91
    %v651 = vunpack.c.l.b16 %v92
    %v652 = vunpack.c.h.b16 %v92
    %v653 = vunpack.c.l.b16 %v93
    %v654 = vunpack.c.h.b16 %v93
    %v655 = vunpack.c.l.b16 %v94
    %v656 = vunpack.c.h.b16 %v94
    %v657 = vunpack.c.l.b16 %v95
    %v658 = vunpack.c.h.b16 %v95
    %v659 = vunpack.c.l.b16 %v96
    %v660 = vunpack.c.h.b16 %v96
    %v661 = vunpack.c.l.b16 %v97
    %v662 = vunpack.c.h.b16 %v97
    %v663 = vunpack.c.l.b16 %v98
    %v664 = vunpack.c.h.b16 %v98
    %v665 = vunpack.c.l.b16 %v99
    %v666 = vunpack.c.h.b16 %v99
    %v667 = vunpack.c.l.b16 %v100
    %v668 = vunpack.c.h.b16 %v100
    %v669 = vunpack.c.l.b16 %v101
    %v670 = vunpack.c.h.b16 %v101
    %v671 = vunpack.c.l.b16 %v102
    %v672 = vunpack.c.h.b16 %v102
    %v673 = vunpack.c.l.b16 %v103
    %v674 = vunpack.c.h.b16 %v103
    %v675 = vunpack.c.l.b16 %v104
    %v676 = vunpack.c.h.b16 %v104
    %v677 = vunpack.c.l.b16 %v105
    %v678 = vunpack.c.h.b16 %v105
    %v679 = vunpack.c.l.b16 %v106
    %v680 = vunpack.c.h.b16 %v106
    %v681 = vunpack.c.l.b16 %v107
    %v682 = vunpack.c.h.b16 %v107
    %v683 = vunpack.c.l.b16 %v108
    %v684 = vunpack.c.h.b16 %v108
    %v685 = vunpack.c.l.b16 %v109
    %v686 = vunpack.c.h.b16 %v109
    %v687 = vunpack.c.l.b16 %v110
    %v688 = vunpack.c.h.b16 %v110
    %v689 = vunpack.c.l.b16 %v111
    %v690 = vunpack.c.h.b16 %v111
    %v691 = vunpack.c.l.b16 %v112
    %v692 = vunpack.c.h.b16 %v112
    %v693 = vunpack.c.l.b16 %v113
    %v694 = vunpack.c.h.b16 %v113
    %v695 = vunpack.c.l.b16 %v114
    %v696 = vunpack.c.h.b16 %v114
    %v697 = vunpack.c.l.b16 %v115
    %v698 = vunpack.c.h.b16 %v115
    %v699 = vunpack.c.l.b16 %v116
    %v700 = vunpack.c.h.b16 %v116
    %v701 = vunpack.c.l.b16 %v117
    %v702 = vunpack.c.h.b16 %v117
    %v703 = vunpack.c.l.b16 %v118
    %v704 = vunpack.c.h.b16 %v118
    %v705 = vunpack.c.l.b16 %v119
    %v706 = vunpack.c.h.b16 %v119
    %v707 = vunpack.c.l.b16 %v120
    %v708 = vunpack.c.h.b16 %v120
    %v709 = vunpack.c.l.b16 %v121
    %v710 = vunpack.c.h.b16 %v121
    %v711 = vunpack.c.l.b16 %v122
    %v712 = vunpack.c.h.b16 %v122
    %v713 = vunpack.c.l.b16 %v123
    %v714 = vunpack.c.h.b16 %v123
    %v715 = vunpack.c.l.b16 %v124
    %v716 = vunpack.c.h.b16 %v124
    %v717 = vunpack.c.l.b16 %v125
    %v718 = vunpack.c.h.b16 %v125
    %v719 = vunpack.c.l.b16 %v126
    %v720 = vunpack.c.h.b16 %v126
    %v721 = vunpack.c.l.b16 %v127
    %v722 = vunpack.c.h.b16 %v127
    %v723 = vunpack.c.l.b16 %v128
    %v724 = vunpack.c.h.b16 %v128
    %v725 = vunpack.c.l.b16 %v129
    %v726 = vunpack.c.h.b16 %v129
    %v727 = vunpack.c.l.b16 %v130
    %v728 = vunpack.c.h.b16 %v130
    %v729 = vunpack.c.l.b16 %v131
    %v730 = vunpack.c.h.b16 %v131
    %v731 = vunpack.c.l.b16 %v132
    %v732 = vunpack.c.h.b16 %v132
    %v733 = vunpack.c.l.b16 %v133
    %v734 = vunpack.c.h.b16 %v133
    %v735 = vunpack.c.l.b16 %v134
    %v736 = vunpack.c.h.b16 %v134
    %v737 = vunpack.c.l.b16 %v135
    %v738 = vunpack.c.h.b16 %v135
    %v739 = vunpack.c.l.b16 %v136
    %v740 = vunpack.c.h.b16 %v136
    %v741 = vunpack.c.l.b16 %v137
    %v742 = vunpack.c.h.b16 %v137
    %v743 = vunpack.c.l.b16 %v138
    %v744 = vunpack.c.h.b16 %v138
    %v745 = vunpack.c.l.b16 %v139
    %v746 = vunpack.c.h.b16 %v139
    %v747 = vunpack.c.l.b16 %v140
    %v748 = vunpack.c.h.b16 %v140
    %v749 = vunpack.c.l.b16 %v141
    %v750 = vunpack.c.h.b16 %v141
    %v751 = vunpack.c.l.b16 %v142
    %v752 = vunpack.c.h.b16 %v142
    %v753 = vunpack.c.l.b16 %v143
    %v754 = vunpack.c.h.b16 %v143
    %v755 = vunpack.c.l.b16 %v144
    %v756 = vunpack.c.h.b16 %v144
    %v757 = vunpack.c.l.b16 %v145
    %v758 = vunpack.c.h.b16 %v145
    %v759 = vunpack.c.l.b16 %v146
    %v760 = vunpack.c.h.b16 %v146
    %v761 = vunpack.c.l.b16 %v147
    %v762 = vunpack.c.h.b16 %v147
    %v763 = vunpack.c.l.b16 %v148
    %v764 = vunpack.c.h.b16 %v148
    %v765 = vunpack.c.l.b16 %v149
    %v766 = vunpack.c.h.b16 %v149
    %v767 = vunpack.c.l.b16 %v150
    %v768 = vunpack.c.h.b16 %v150
    %v769 = vunpack.c.l.b16 %v151
    %v770 = vunpack.c.h.b16 %v151
    %v771 = vunpack.c.l.b16 %v152
    %v772 = vunpack.c.h.b16 %v152
    %v773 = vunpack.c.l.b16 %v153
    %v774 = vunpack.c.h.b16 %v153
    %v775 = vunpack.c.l.b16 %v154
    %v776 = vunpack.c.h.b16 %v154
    %v777 = vunpack.c.l.b16 %v155
    %v778 = vunpack.c.h.b16 %v155
    %v779 = vunpack.c.l.b16 %v156
    %v780 = vunpack.c.h.b16 %v156
    %v781 = vunpack.c.l.b16 %v157
    %v782 = vunpack.c.h.b16 %v157
    %v783 = vunpack.c.l.b16 %v158
    %v784 = vunpack.c.h.b16 %v158
    %v785 = vunpack.c.l.b16 %v159
    %v786 = vunpack.c.h.b16 %v159
    %v787 = vunpack.c.l.b16 %v160
    %v788 = vunpack.c.h.b16 %v160
    %v789 = vunpack.c.l.b16 %v161
    %v790 = vunpack.c.h.b16 %v161
    %v791 = vunpack.c.l.b16 %v162
    %v792 = vunpack.c.h.b16 %v162
    %v793 = vunpack.c.l.b16 %v163
    %v794 = vunpack.c.h.b16 %v163
    %v795 = vunpack.c.l.b16 %v164
    %v796 = vunpack.c.h.b16 %v164
    %v797 = vunpack.c.l.b16 %v165
    %v798 = vunpack.c.h.b16 %v165
    %v799 = vunpack.c.l.b16 %v166
    %v800 = vunpack.c.h.b16 %v166
    %v801 = vunpack.c.l.b16 %v167
    %v802 = vunpack.c.h.b16 %v167
    %v803 = vunpack.c.l.b16 %v168
    %v804 = vunpack.c.h.b16 %v168
    %v805 = vunpack.c.l.b16 %v169
    %v806 = vunpack.c.h.b16 %v169
    %v807 = vunpack.c.l.b16 %v170
    %v808 = vunpack.c.h.b16 %v170
    %v809 = vunpack.c.l.b16 %v171
    %v810 = vunpack.c.h.b16 %v171
    %v811 = vunpack.c.l.b16 %v172
    %v812 = vunpack.c.h.b16 %v172
    %v813 = vunpack.c.l.b16 %v173
    %v814 = vunpack.c.h.b16 %v173
    %v815 = vunpack.c.l.b16 %v174
    %v816 = vunpack.c.h.b16 %v174
    %v817 = vunpack.c.l.b16 %v175
    %v818 = vunpack.c.h.b16 %v175
    %v819 = vunpack.c.l.b16 %v176
    %v820 = vunpack.c.h.b16 %v176
    %v821 = vunpack.c.l.b16 %v177
    %v822 = vunpack.c.h.b16 %v177
    %v823 = vunpack.c.l.b16 %v178
    %v824 = vunpack.c.h.b16 %v178
    %v825 = vunpack.c.l.b16 %v179
    %v826 = vunpack.c.h.b16 %v179
    %v827 = vunpack.c.l.b16 %v180
    %v828 = vunpack.c.h.b16 %v180
    %v829 = vunpack.c.l.b16 %v181
    %v830 = vunpack.c.h.b16 %v181
    %v831 = vunpack.c.l.b16 %v182
    %v832 = vunpack.c.h.b16 %v182
    %v833 = vunpack.c.l.b16 %v183
    %v834 = vunpack.c.h.b16 %v183
    %v835 = vunpack.c.l.b16 %v184
    %v836 = vunpack.c.h.b16 %v184
    %v837 = vunpack.c.l.b16 %v185
    %v838 = vunpack.c.h.b16 %v185
    %v839 = vunpack.c.l.b16 %v186
    %v840 = vunpack.c.h.b16 %v186
    %v841 = vunpack.c.l.b16 %v187
    %v842 = vunpack.c.h.b16 %v187
    %v843 = vunpack.c.l.b16 %v188
    %v844 = vunpack.c.h.b16 %v188
    %v845 = vunpack.c.l.b16 %v189
    %v846 = vunpack.c.h.b16 %v189
    %v847 = vunpack.c.l.b16 %v190
    %v848 = vunpack.c.h.b16 %v190
    %v849 = vunpack.c.l.b16 %v191
    %v850 = vunpack.c.h.b16 %v191
    %v851 = vunpack.c.l.b16 %v192
    %v852 = vunpack.c.h.b16 %v192
    %v853 = vunpack.c.l.b16 %v193
    %v854 = vunpack.c.h.b16 %v193
    %v855 = vunpack.c.l.b16 %v194
    %v856 = vunpack.c.h.b16 %v194
    %v857 = vunpack.c.l.b16 %v195
    %v858 = vunpack.c.h.b16 %v195
    %v859 = vunpack.c.l.b16 %v196
    %v860 = vunpack.c.h.b16 %v196
    %v861 = vunpack.c.l.b16 %v197
    %v862 = vunpack.c.h.b16 %v197
    %v863 = vunpack.c.l.b16 %v198
    %v864 = vunpack.c.h.b16 %v198
    %v865 = vunpack.c.l.b16 %v199
    %v866 = vunpack.c.h.b16 %v199
    %v867 = vunpack.c.l.b16 %v200
    %v868 = vunpack.c.h.b16 %v200
    %v869 = vunpack.c.l.b16 %v201
    %v870 = vunpack.c.h.b16 %v201
    %v871 = vunpack.c.l.b16 %v202
    %v872 = vunpack.c.h.b16 %v202
    %v873 = vunpack.c.l.b16 %v203
    %v874 = vunpack.c.h.b16 %v203
    %v875 = vunpack.c.l.b16 %v204
    %v876 = vunpack.c.h.b16 %v204
    %v877 = vunpack.c.l.b16 %v205
    %v878 = vunpack.c.h.b16 %v205
    %v879 = vunpack.c.l.b16 %v206
    %v880 = vunpack.c.h.b16 %v206
    %v881 = vunpack.c.l.b16 %v207
    %v882 = vunpack.c.h.b16 %v207
    %v883 = vunpack.c.l.b16 %v208
    %v884 = vunpack.c.h.b16 %v208
    %v885 = vunpack.c.l.b16 %v209
    %v886 = vunpack.c.h.b16 %v209
    %v887 = vunpack.c.l.b16 %v210
    %v888 = vunpack.c.h.b16 %v210
    %v889 = vunpack.c.l.b16 %v211
    %v890 = vunpack.c.h.b16 %v211
    %v891 = vunpack.c.l.b16 %v212
    %v892 = vunpack.c.h.b16 %v212
    %v893 = vunpack.c.l.b16 %v213
    %v894 = vunpack.c.h.b16 %v213
    %v895 = vunpack.c.l.b16 %v214
    %v896 = vunpack.c.h.b16 %v214
    %v897 = vunpack.c.l.b16 %v215
    %v898 = vunpack.c.h.b16 %v215
    %v899 = vunpack.c.l.b16 %v216
    %v900 = vunpack.c.h.b16 %v216
    %v901 = vunpack.c.l.b16 %v217
    %v902 = vunpack.c.h.b16 %v217
    %v903 = vunpack.c.l.b16 %v218
    %v904 = vunpack.c.h.b16 %v218
    %v905 = vunpack.c.l.b16 %v219
    %v906 = vunpack.c.h.b16 %v219
    %v907 = vunpack.c.l.b16 %v220
    %v908 = vunpack.c.h.b16 %v220
    %v909 = vunpack.c.l.b16 %v221
    %v910 = vunpack.c.h.b16 %v221
    %v911 = vunpack.c.l.b16 %v222
    %v912 = vunpack.c.h.b16 %v222
    %v913 = vunpack.c.l.b16 %v223
    %v914 = vunpack.c.h.b16 %v223
    %v915 = vunpack.c.l.b16 %v224
    %v916 = vunpack.c.h.b16 %v224
    %v917 = vunpack.c.l.b16 %v225
    %v918 = vunpack.c.h.b16 %v225
    %v919 = vunpack.c.l.b16 %v226
    %v920 = vunpack.c.h.b16 %v226
    %v921 = vunpack.c.l.b16 %v227
    %v922 = vunpack.c.h.b16 %v227
    %v923 = vunpack.c.l.b16 %v228
    %v924 = vunpack.c.h.b16 %v228
    %v925 = vunpack.c.l.b16 %v229
    %v926 = vunpack.c.h.b16 %v229
    %v927 = vunpack.c.l.b16 %v230
    %v928 = vunpack.c.h.b16 %v230
    %v929 = vunpack.c.l.b16 %v231
    %v930 = vunpack.c.h.b16 %v231
    %v931 = vunpack.c.l.b16 %v232
    %v932 = vunpack.c.h.b16 %v232
    %v933 = vunpack.c.l.b16 %v233
    %v934 = vunpack.c.h.b16 %v233
    %v935 = vunpack.c.l.b16 %v234
    %v936 = vunpack.c.h.b16 %v234
    %v937 = vunpack.c.l.b16 %v235
    %v938 = vunpack.c.h.b16 %v235
    %v939 = vunpack.c.l.b16 %v236
    %v940 = vunpack.c.h.b16 %v236
    %v941 = vunpack.c.l.b16 %v237
    %v942 = vunpack.c.h.b16 %v237
    %v943 = vunpack.c.l.b16 %v238
    %v944 = vunpack.c.h.b16 %v238
    %v945 = vunpack.c.l.b16 %v239
    %v946 = vunpack.c.h.b16 %v239
    %v947 = vunpack.c.l.b16 %v240
    %v948 = vunpack.c.h.b16 %v240
    %v949 = vunpack.c.l.b16 %v241
    %v950 = vunpack.c.h.b16 %v241
    %v951 = vunpack.c.l.b16 %v242
    %v952 = vunpack.c.h.b16 %v242
    %v953 = vunpack.c.l.b16 %v243
    %v954 = vunpack.c.h.b16 %v243
    %v955 = vunpack.c.l.b16 %v244
    %v956 = vunpack.c.h.b16 %v244
    %v957 = vunpack.c.l.b16 %v245
    %v958 = vunpack.c.h.b16 %v245
    %v959 = vunpack.c.l.b16 %v246
    %v960 = vunpack.c.h.b16 %v246
    %v961 = vunpack.c.l.b16 %v247
    %v962 = vunpack.c.h.b16 %v247
    %v963 = vunpack.c.l.b16 %v248
    %v964 = vunpack.c.h.b16 %v248
    %v965 = vunpack.c.l.b16 %v249
    %v966 = vunpack.c.h.b16 %v249
    %v967 = vunpack.c.l.b16 %v250
    %v968 = vunpack.c.h.b16 %v250
    %v969 = vunpack.c.l.b16 %v251
    %v970 = vunpack.c.h.b16 %v251
    %v971 = vunpack.c.l.b16 %v252
    %v972 = vunpack.c.h.b16 %v252
    %v973 = vunpack.c.l.b16 %v253
    %v974 = vunpack.c.h.b16 %v253
    %v975 = vunpack.c.l.b16 %v254
    %v976 = vunpack.c.h.b16 %v254
    %v977 = vunpack.c.l.b16 %v255
    %v978 = vunpack.c.h.b16 %v255
    %v979 = vunpack.c.l.b16 %v256
    %v980 = vunpack.c.h.b16 %v256
    %v981 = vunpack.c.l.b16 %v257
    %v982 = vunpack.c.h.b16 %v257
    %v983 = vunpack.c.l.b16 %v258
    %v984 = vunpack.c.h.b16 %v258
    %v985 = vunpack.c.l.b16 %v259
    %v986 = vunpack.c.h.b16 %v259
    %v987 = vunpack.c.l.b16 %v260
    %v988 = vunpack.c.h.b16 %v260
    %v989 = vunpack.c.l.b16 %v261
    %v990 = vunpack.c.h.b16 %v261
    %v991 = vunpack.c.l.b16 %v262
    %v992 = vunpack.c.h.b16 %v262
    %v993 = vunpack.c.l.b16 %v263
    %v994 = vunpack.c.h.b16 %v263
    %v995 = vunpack.c.l.b16 %v264
    %v996 = vunpack.c.h.b16 %v264
    %v997 = vunpack.c.l.b16 %v265
    %v998 = vunpack.c.h.b16 %v265
    %v999 = vunpack.c.l.b16 %v266
    %v1000 = vunpack.c.h.b16 %v266
    %v1001 = vunpack.c.l.b16 %v267
    %v1002 = vunpack.c.h.b16 %v267
    %v1003 = vunpack.c.l.b16 %v268
    %v1004 = vunpack.c.h.b16 %v268
    %v1005 = vunpack.c.l.b16 %v269
    %v1006 = vunpack.c.h.b16 %v269
    %v1007 = vunpack.c.l.b16 %v270
    %v1008 = vunpack.c.h.b16 %v270
    %v1009 = vunpack.c.l.b16 %v271
    %v1010 = vunpack.c.h.b16 %v271
    %v1011 = vunpack.c.l.b16 %v272
    %v1012 = vunpack.c.h.b16 %v272
    %v1013 = vunpack.c.l.b16 %v273
    %v1014 = vunpack.c.h.b16 %v273
    %v1015 = vunpack.c.l.b16 %v274
    %v1016 = vunpack.c.h.b16 %v274
    %v1017 = vunpack.c.l.b16 %v275
    %v1018 = vunpack.c.h.b16 %v275
    %v1019 = vunpack.c.l.b16 %v276
    %v1020 = vunpack.c.h.b16 %v276
    %v1021 = vunpack.c.l.b16 %v277
    %v1022 = vunpack.c.h.b16 %v277
    %v1023 = vunpack.c.l.b16 %v278
    %v1024 = vunpack.c.h.b16 %v278
    %v1025 = vunpack.c.l.b16 %v279
    %v1026 = vunpack.c.h.b16 %v279
    %v1027 = vunpack.c.l.b16 %v280
    %v1028 = vunpack.c.h.b16 %v280
    %v1029 = vunpack.c.l.b16 %v281
    %v1030 = vunpack.c.h.b16 %v281
    %v1031 = vunpack.c.l.b16 %v282
    %v1032 = vunpack.c.h.b16 %v282
    %v1033 = vunpack.c.l.b16 %v283
    %v1034 = vunpack.c.h.b16 %v283
    %v1035 = vunpack.c.l.b16 %v284
    %v1036 = vunpack.c.h.b16 %v284
    %v1037 = vunpack.c.l.b16 %v285
    %v1038 = vunpack.c.h.b16 %v285
    %v1039 = vunpack.c.l.b16 %v286
    %v1040 = vunpack.c.h.b16 %v286
    %v1041 = vunpack.c.l.b16 %v287
    %v1042 = vunpack.c.h.b16 %v287
    %v1043 = vunpack.c.l.b16 %v288
    %v1044 = vunpack.c.h.b16 %v288
    %v1045 = vunpack.c.l.b16 %v289
    %v1046 = vunpack.c.h.b16 %v289
    %v1047 = vunpack.c.l.b16 %v290
    %v1048 = vunpack.c.h.b16 %v290
    %v1049 = vunpack.c.l.b16 %v291
    %v1050 = vunpack.c.h.b16 %v291
    %v1051 = vunpack.c.l.b16 %v292
    %v1052 = vunpack.c.h.b16 %v292
    %v1053 = vunpack.c.l.b16 %v293
    %v1054 = vunpack.c.h.b16 %v293
    %v1055 = vunpack.c.l.b16 %v294
    %v1056 = vunpack.c.h.b16 %v294
    %v1057 = vunpack.c.l.b16 %v295
    %v1058 = vunpack.c.h.b16 %v295
    %v1059 = vunpack.c.l.b16 %v296
    %v1060 = vunpack.c.h.b16 %v296
    %v1061 = vunpack.c.l.b16 %v297
    %v1062 = vunpack.c.h.b16 %v297
    %v1063 = vunpack.c.l.b16 %v298
    %v1064 = vunpack.c.h.b16 %v298
    %v1065 = vunpack.c.l.b16 %v299
    %v1066 = vunpack.c.h.b16 %v299
    %v1067 = vunpack.c.l.b16 %v300
    %v1068 = vunpack.c.h.b16 %v300
    %v1069 = vpack.c.b16 %v561, %v557
    %v1070 = vpack.c.b16 %v562, %v558
    %v1071 = vpack.c.b16 %v563, %v559
    %v1072 = vpack.c.b16 %v564, %v560
    %v1073 = vpack.c.b16 %v569, %v565
    %v1074 = vpack.c.b16 %v570, %v566
    %v1075 = vpack.c.b16 %v571, %v567
    %v1076 = vpack.c.b16 %v572, %v568
    %v1077 = vpack.c.b16 %v577, %v573
    %v1078 = vpack.c.b16 %v578, %v574
    %v1079 = vpack.c.b16 %v579, %v575
    %v1080 = vpack.c.b16 %v580, %v576
    %v1081 = vpack.c.b16 %v585, %v581
    %v1082 = vpack.c.b16 %v586, %v582
    %v1083 = vpack.c.b16 %v587, %v583
    %v1084 = vpack.c.b16 %v588, %v584
    %v1085 = vpack.c.b16 %v593, %v589
    %v1086 = vpack.c.b16 %v594, %v590
    %v1087 = vpack.c.b16 %v595, %v591
    %v1088 = vpack.c.b16 %v596, %v592
    %v1089 = vpack.c.b16 %v601, %v597
    %v1090 = vpack.c.b16 %v602, %v598
    %v1091 = vpack.c.b16 %v603, %v599
    %v1092 = vpack.c.b16 %v604, %v600
    %v1093 = vpack.c.b16 %v609, %v605
    %v1094 = vpack.c.b16 %v610, %v606
    %v1095 = vpack.c.b16 %v611, %v607
    %v1096 = vpack.c.b16 %v612, %v608
    %v1097 = vpack.c.b16 %v617, %v613
    %v1098 = vpack.c.b16 %v618, %v614
    %v1099 = vpack.c.b16 %v619, %v615
    %v1100 = vpack.c.b16 %v620, %v616
    %v1101 = vpack.c.b16 %v625, %v621
    %v1102 = vpack.c.b16 %v626, %v622
    %v1103 = vpack.c.b16 %v627, %v623
    %v1104 = vpack.c.b16 %v628, %v624
    %v1105 = vpack.c.b16 %v633, %v629
    %v1106 = vpack.c.b16 %v634, %v630
    %v1107 = vpack.c.b16 %v635, %v631
    %v1108 = vpack.c.b16 %v636, %v632
    %v1109 = vpack.c.b16 %v641, %v637
    %v1110 = vpack.c.b16 %v642, %v638
    %v1111 = vpack.c.b16 %v643, %v639
    %v1112 = vpack.c.b16 %v644, %v640
    %v1113 = vpack.c.b16 %v649, %v645
    %v1114 = vpack.c.b16 %v650, %v646
    %v1115 = vpack.c.b16 %v651, %v647
    %v1116 = vpack.c.b16 %v652, %v648
    %v1117 = vpack.c.b16 %v657, %v653
    %v1118 = vpack.c.b16 %v658, %v654
    %v1119 = vpack.c.b16 %v659, %v655
    %v1120 = vpack.c.b16 %v660, %v656
    %v1121 = vpack.c.b16 %v665, %v661
    %v1122 = vpack.c.b16 %v666, %v662
    %v1123 = vpack.c.b16 %v667, %v663
    %v1124 = vpack.c.b16 %v668, %v664
    %v1125 = vpack.c.b16 %v673, %v669
    %v1126 = vpack.c.b16 %v674, %v670
    %v1127 = vpack.c.b16 %v675, %v671
    %v1128 = vpack.c.b16 %v676, %v672
    %v1129 = vpack.c.b16 %v681, %v677
    %v1130 = vpack.c.b16 %v682, %v678
    %v1131 = vpack.c.b16 %v683, %v679
    %v1132 = vpack.c.b16 %v684, %v680
    %v1133 = vpack.c.b16 %v689, %v685
    %v1134 = vpack.c.b16 %v690, %v686
    %v1135 = vpack.c.b16 %v691, %v687
    %v1136 = vpack.c.b16 %v692, %v688
    %v1137 = vpack.c.b16 %v697, %v693
    %v1138 = vpack.c.b16 %v698, %v694
    %v1139 = vpack.c.b16 %v699, %v695
    %v1140 = vpack.c.b16 %v700, %v696
    %v1141 = vpack.c.b16 %v705, %v701
    %v1142 = vpack.c.b16 %v706, %v702
    %v1143 = vpack.c.b16 %v707, %v703
    %v1144 = vpack.c.b16 %v708, %v704
    %v1145 = vpack.c.b16 %v713, %v709
    %v1146 = vpack.c.b16 %v714, %v710
    %v1147 = vpack.c.b16 %v715, %v711
    %v1148 = vpack.c.b16 %v716, %v712
    %v1149 = vpack.c.b16 %v721, %v717
    %v1150 = vpack.c.b16 %v722, %v718
    %v1151 = vpack.c.b16 %v723, %v719
    %v1152 = vpack.c.b16 %v724, %v720
    %v1153 = vpack.c.b16 %v729, %v725
    %v1154 = vpack.c.b16 %v730, %v726
    %v1155 = vpack.c.b16 %v731, %v727
    %v1156 = vpack.c.b16 %v732, %v728
    %v1157 = vpack.c.b16 %v737, %v733
    %v1158 = vpack.c.b16 %v738, %v734
    %v1159 = vpack.c.b16 %v739, %v735
    %v1160 = vpack.c.b16 %v740, %v736
    %v1161 = vpack.c.b16 %v745, %v741
    %v1162 = vpack.c.b16 %v746, %v742
    %v1163 = vpack.c.b16 %v747, %v743
    %v1164 = vpack.c.b16 %v748, %v744
    %v1165 = vpack.c.b16 %v753, %v749
    %v1166 = vpack.c.b16 %v754, %v750
    %v1167 = vpack.c.b16 %v755, %v751
    %v1168 = vpack.c.b16 %v756, %v752
    %v1169 = vpack.c.b16 %v761, %v757
    %v1170 = vpack.c.b16 %v762, %v758
    %v1171 = vpack.c.b16 %v763, %v759
    %v1172 = vpack.c.b16 %v764, %v760
    %v1173 = vpack.c.b16 %v769, %v765
    %v1174 = vpack.c.b16 %v770, %v766
    %v1175 = vpack.c.b16 %v771, %v767
    %v1176 = vpack.c.b16 %v772, %v768
    %v1177 = vpack.c.b16 %v777, %v773
    %v1178 = vpack.c.b16 %v778, %v774
    %v1179 = vpack.c.b16 %v779, %v775
    %v1180 = vpack.c.b16 %v780, %v776
    %v1181 = vpack.c.b16 %v785, %v781
    %v1182 = vpack.c.b16 %v786, %v782
    %v1183 = vpack.c.b16 %v787, %v783
    %v1184 = vpack.c.b16 %v788, %v784
    %v1185 = vpack.c.b16 %v793, %v789
    %v1186 = vpack.c.b16 %v794, %v790
    %v1187 = vpack.c.b16 %v795, %v791
    %v1188 = vpack.c.b16 %v796, %v792
    %v1189 = vpack.c.b16 %v801, %v797
    %v1190 = vpack.c.b16 %v802, %v798
    %v1191 = vpack.c.b16 %v803, %v799
    %v1192 = vpack.c.b16 %v804, %v800
    %v1193 = vpack.c.b16 %v809, %v805
    %v1194 = vpack.c.b16 %v810, %v806
    %v1195 = vpack.c.b16 %v811, %v807
    %v1196 = vpack.c.b16 %v812, %v808
    %v1197 = vpack.c.b16 %v817, %v813
    %v1198 = vpack.c.b16 %v818, %v814
    %v1199 = vpack.c.b16 %v819, %v815
    %v1200 = vpack.c.b16 %v820, %v816
    %v1201 = vpack.c.b16 %v825, %v821
    %v1202 = vpack.c.b16 %v826, %v822
    %v1203 = vpack.c.b16 %v827, %v823
    %v1204 = vpack.c.b16 %v828, %v824
    %v1205 = vpack.c.b16 %v833, %v829
    %v1206 = vpack.c.b16 %v834, %v830
    %v1207 = vpack.c.b16 %v835, %v831
    %v1208 = vpack.c.b16 %v836, %v832
    %v1209 = vpack.c.b16 %v841, %v837
    %v1210 = vpack.c.b16 %v842, %v838
    %v1211 = vpack.c.b16 %v843, %v839
    %v1212 = vpack.c.b16 %v844, %v840
    %v1213 = vpack.c.b16 %v849, %v845
    %v1214 = vpack.c.b16 %v850, %v846
    %v1215 = vpack.c.b16 %v851, %v847
    %v1216 = vpack.c.b16 %v852, %v848
    %v1217 = vpack.c.b16 %v857, %v853
    %v1218 = vpack.c.b16 %v858, %v854
    %v1219 = vpack.c.b16 %v859, %v855
    %v1220 = vpack.c.b16 %v860, %v856
    %v1221 = vpack.c.b16 %v865, %v861
    %v1222 = vpack.c.b16 %v866, %v862
    %v1223 = vpack.c.b16 %v867, %v863
    %v1224 = vpack.c.b16 %v868, %v864
    %v1225 = vpack.c.b16 %v873, %v869
    %v1226 = vpack.c.b16 %v874, %v870
    %v1227 = vpack.c.b16 %v875, %v871
    %v1228 = vpack.c.b16 %v876, %v872
    %v1229 = vpack.c.b16 %v881, %v877
    %v1230 = vpack.c.b16 %v882, %v878
    %v1231 = vpack.c.b16 %v883, %v879
    %v1232 = vpack.c.b16 %v884, %v880
    %v1233 = vpack.c.b16 %v889, %v885
    %v1234 = vpack.c.b16 %v890, %v886
    %v1235 = vpack.c.b16 %v891, %v887
    %v1236 = vpack.c.b16 %v892, %v888
    %v1237 = vpack.c.b16 %v897, %v893
    %v1238 = vpack.c.b16 %v898, %v894
    %v1239 = vpack.c.b16 %v899, %v895
    %v1240 = vpack.c.b16 %v900, %v896
    %v1241 = vpack.c.b16 %v905, %v901
    %v1242 = vpack.c.b16 %v906, %v902
    %v1243 = vpack.c.b16 %v907, %v903
    %v1244 = vpack.c.b16 %v908, %v904
    %v1245 = vpack.c.b16 %v913, %v909
    %v1246 = vpack.c.b16 %v914, %v910
    %v1247 = vpack.c.b16 %v915, %v911
    %v1248 = vpack.c.b16 %v916, %v912
    %v1249 = vpack.c.b16 %v921, %v917
    %v1250 = vpack.c.b16 %v922, %v918
    %v1251 = vpack.c.b16 %v923, %v919
    %v1252 = vpack.c.b16 %v924, %v920
    %v1253 = vpack.c.b16 %v929, %v925
    %v1254 = vpack.c.b16 %v930, %v926
    %v1255 = vpack.c.b16 %v931, %v927
    %v1256 = vpack.c.b16 %v932, %v928
    %v1257 = vpack.c.b16 %v937, %v933
    %v1258 = vpack.c.b16 %v938, %v934
    %v1259 = vpack.c.b16 %v939, %v935
    %v1260 = vpack.c.b16 %v940, %v936
    %v1261 = vpack.c.b16 %v945, %v941
    %v1262 = vpack.c.b16 %v946, %v942
    %v1263 = vpack.c.b16 %v947, %v943
    %v1264 = vpack.c.b16 %v948, %v944
    %v1265 = vpack.c.b16 %v953, %v949
    %v1266 = vpack.c.b16 %v954, %v950
    %v1267 = vpack.c.b16 %v955, %v951
    %v1268 = vpack.c.b16 %v956, %v952
    %v1269 = vpack.c.b16 %v961, %v957
    %v1270 = vpack.c.b16 %v962, %v958
    %v1271 = vpack.c.b16 %v963, %v959
    %v1272 = vpack.c.b16 %v964, %v960
    %v1273 = vpack.c.b16 %v969, %v965
    %v1274 = vpack.c.b16 %v970, %v966
    %v1275 = vpack.c.b16 %v971, %v967
    %v1276 = vpack.c.b16 %v972, %v968
    %v1277 = vpack.c.b16 %v977, %v973
    %v1278 = vpack.c.b16 %v978, %v974
    %v1279 = vpack.c.b16 %v979, %v975
    %v1280 = vpack.c.b16 %v980, %v976
    %v1281 = vpack.c.b16 %v985, %v981
    %v1282 = vpack.c.b16 %v986, %v982
    %v1283 = vpack.c.b16 %v987, %v983
    %v1284 = vpack.c.b16 %v988, %v984
    %v1285 = vpack.c.b16 %v993, %v989
    %v1286 = vpack.c.b16 %v994, %v990
    %v1287 = vpack.c.b16 %v995, %v991
    %v1288 = vpack.c.b16 %v996, %v992
    %v1289 = vpack.c.b16 %v1001, %v997
    %v1290 = vpack.c.b16 %v1002, %v998
    %v1291 = vpack.c.b16 %v1003, %v999
    %v1292 = vpack.c.b16 %v1004, %v1000
    %v1293 = vpack.c.b16 %v1009, %v1005
    %v1294 = vpack.c.b16 %v1010, %v1006
    %v1295 = vpack.c.b16 %v1011, %v1007
    %v1296 = vpack.c.b16 %v1012, %v1008
    %v1297 = vpack.c.b16 %v1017, %v1013
    %v1298 = vpack.c.b16 %v1018, %v1014
    %v1299 = vpack.c.b16 %v1019, %v1015
    %v1300 = vpack.c.b16 %v1020, %v1016
    %v1301 = vpack.c.b16 %v1025, %v1021
    %v1302 = vpack.c.b16 %v1026, %v1022
    %v1303 = vpack.c.b16 %v1027, %v1023
    %v1304 = vpack.c.b16 %v1028, %v1024
    %v1305 = vpack.c.b16 %v1033, %v1029
    %v1306 = vpack.c.b16 %v1034, %v1030
    %v1307 = vpack.c.b16 %v1035, %v1031
    %v1308 = vpack.c.b16 %v1036, %v1032
    %v1309 = vpack.c.b16 %v1041, %v1037
    %v1310 = vpack.c.b16 %v1042, %v1038
    %v1311 = vpack.c.b16 %v1043, %v1039
    %v1312 = vpack.c.b16 %v1044, %v1040
    %v1313 = vpack.c.b16 %v1049, %v1045
    %v1314 = vpack.c.b16 %v1050, %v1046
    %v1315 = vpack.c.b16 %v1051, %v1047
    %v1316 = vpack.c.b16 %v1052, %v1048
    %v1317 = vpack.c.b16 %v1057, %v1053
    %v1318 = vpack.c.b16 %v1058, %v1054
    %v1319 = vpack.c.b16 %v1059, %v1055
    %v1320 = vpack.c.b16 %v1060, %v1056
    %v1321 = vpack.c.b16 %v1065, %v1061
    %v1322 = vpack.c.b16 %v1066, %v1062
    %v1323 = vpack.c.b16 %v1067, %v1063
    %v1324 = vpack.c.b16 %v1068, %v1064
    %1581 = vmatprep.subr.bf16.mxu0 %v1098
    %1582 = vmatpush1.bf16.msra.mxu0 %v1097
    %1583 = vmatprep.subr.bf16.mxu0 %v1094
    %1584 = vmatpush1.bf16.msra.mxu0 %v1093
    %1585 = vmatprep.subr.bf16.mxu0 %v1090
    %1586 = vmatpush1.bf16.msra.mxu0 %v1089
    %1587 = vmatprep.subr.bf16.mxu0 %v1086
    %1588 = vmatpush1.bf16.msra.mxu0 %v1085
    %1589 = vmatprep.subr.bf16.mxu0 %v1082
    %1590 = vmatpush1.bf16.msra.mxu0 %v1081
    %1591 = vmatprep.subr.bf16.mxu0 %v1078
    %1592 = vmatpush1.bf16.msra.mxu0 %v1077
    %1593 = vmatprep.subr.bf16.mxu0 %v1074
    %1594 = vmatpush1.bf16.msra.mxu0 %v1073
    %1595 = vmatprep.subr.bf16.mxu0 %v1070
    %1596 = vmatpush1.bf16.msra.mxu0 %v1069
    %1597 = vmatprep.subr.bf16.mxu0 %v1130
    %1598 = vmatpush2.bf16.msra.mxu0 %v1129
    %1599 = vmatprep.subr.bf16.mxu0 %v1126
    %1600 = vmatpush2.bf16.msra.mxu0 %v1125
    %1601 = vmatprep.subr.bf16.mxu0 %v1122
    %1602 = vmatpush2.bf16.msra.mxu0 %v1121
    %1603 = vmatprep.subr.bf16.mxu0 %v1118
    %1604 = vmatpush2.bf16.msra.mxu0 %v1117
    %1605 = vmatprep.subr.bf16.mxu0 %v1114
    %1606 = vmatpush2.bf16.msra.mxu0 %v1113
    %1607 = vmatprep.subr.bf16.mxu0 %v1110
    %1608 = vmatpush2.bf16.msra.mxu0 %v1109
    %1609 = vmatprep.subr.bf16.mxu0 %v1106
    %1610 = vmatpush2.bf16.msra.mxu0 %v1105
    %1611 = vmatprep.subr.bf16.mxu0 %v1102
    %1612 = vmatpush2.bf16.msra.mxu0 %v1101
    %1613 = vmatprep.mubr.bf16.mxu0 %v38
    %1614 = vmatmul.mubr.bf16.gmra.mxu0 %v37
    %v1615 = vpop.f32.mrf.mxu0
    %v1616 = vadd.f32 0.0, %v1615
    %v1617 = vpop.f32.mrf.mxu0
    %v1618 = vadd.f32 0.0, %v1617
    %v1619 = vpop.f32.mrf.mxu0
    %v1620 = vpop.f32.mrf.mxu0
    %1621 = vdwg.mxu0
    %1622 = vmatprep.subr.bf16.mxu0 %v1162
    %1623 = vmatpush1.bf16.msra.mxu0 %v1161
    %1624 = vmatprep.subr.bf16.mxu0 %v1158
    %1625 = vmatpush1.bf16.msra.mxu0 %v1157
    %1626 = vmatprep.subr.bf16.mxu0 %v1154
    %1627 = vmatpush1.bf16.msra.mxu0 %v1153
    %1628 = vmatprep.subr.bf16.mxu0 %v1150
    %1629 = vmatpush1.bf16.msra.mxu0 %v1149
    %1630 = vmatprep.subr.bf16.mxu0 %v1146
    %1631 = vmatpush1.bf16.msra.mxu0 %v1145
    %1632 = vmatprep.subr.bf16.mxu0 %v1142
    %1633 = vmatpush1.bf16.msra.mxu0 %v1141
    %1634 = vmatprep.subr.bf16.mxu0 %v1138
    %1635 = vmatpush1.bf16.msra.mxu0 %v1137
    %1636 = vmatprep.subr.bf16.mxu0 %v1134
    %1637 = vmatpush1.bf16.msra.mxu0 %v1133
    %1638 = vmatprep.subr.bf16.mxu0 %v1194
    %1639 = vmatpush2.bf16.msra.mxu0 %v1193
    %1640 = vmatprep.subr.bf16.mxu0 %v1190
    %1641 = vmatpush2.bf16.msra.mxu0 %v1189
    %1642 = vmatprep.subr.bf16.mxu0 %v1186
    %1643 = vmatpush2.bf16.msra.mxu0 %v1185
    %1644 = vmatprep.subr.bf16.mxu0 %v1182
    %1645 = vmatpush2.bf16.msra.mxu0 %v1181
    %1646 = vmatprep.subr.bf16.mxu0 %v1178
    %1647 = vmatpush2.bf16.msra.mxu0 %v1177
    %1648 = vmatprep.subr.bf16.mxu0 %v1174
    %1649 = vmatpush2.bf16.msra.mxu0 %v1173
    %1650 = vmatprep.subr.bf16.mxu0 %v1170
    %1651 = vmatpush2.bf16.msra.mxu0 %v1169
    %1652 = vmatprep.subr.bf16.mxu0 %v1166
    %1653 = vmatpush2.bf16.msra.mxu0 %v1165
    %1654 = vmatprep.mubr.bf16.mxu0 %v40
    %1655 = vmatmul.mubr.bf16.gmra.mxu0 %v39
    %v1656 = vpop.f32.mrf.mxu0
    %v1657 = vadd.f32 %v1616, %v1656
    %v1658 = vpop.f32.mrf.mxu0
    %v1659 = vadd.f32 %v1618, %v1658
    %v1660 = vpop.f32.mrf.mxu0
    %v1661 = vpop.f32.mrf.mxu0
    %1662 = vdwg.mxu0
    %1663 = vmatprep.subr.bf16.mxu0 %v1226
    %1664 = vmatpush1.bf16.msra.mxu0 %v1225
    %1665 = vmatprep.subr.bf16.mxu0 %v1222
    %1666 = vmatpush1.bf16.msra.mxu0 %v1221
    %1667 = vmatprep.subr.bf16.mxu0 %v1218
    %1668 = vmatpush1.bf16.msra.mxu0 %v1217
    %1669 = vmatprep.subr.bf16.mxu0 %v1214
    %1670 = vmatpush1.bf16.msra.mxu0 %v1213
    %1671 = vmatprep.subr.bf16.mxu0 %v1210
    %1672 = vmatpush1.bf16.msra.mxu0 %v1209
    %1673 = vmatprep.subr.bf16.mxu0 %v1206
    %1674 = vmatpush1.bf16.msra.mxu0 %v1205
    %1675 = vmatprep.subr.bf16.mxu0 %v1202
    %1676 = vmatpush1.bf16.msra.mxu0 %v1201
    %1677 = vmatprep.subr.bf16.mxu0 %v1198
    %1678 = vmatpush1.bf16.msra.mxu0 %v1197
    %1679 = vmatprep.subr.bf16.mxu0 %v1258
    %1680 = vmatpush2.bf16.msra.mxu0 %v1257
    %1681 = vmatprep.subr.bf16.mxu0 %v1254
    %1682 = vmatpush2.bf16.msra.mxu0 %v1253
    %1683 = vmatprep.subr.bf16.mxu0 %v1250
    %1684 = vmatpush2.bf16.msra.mxu0 %v1249
    %1685 = vmatprep.subr.bf16.mxu0 %v1246
    %1686 = vmatpush2.bf16.msra.mxu0 %v1245
    %1687 = vmatprep.subr.bf16.mxu0 %v1242
    %1688 = vmatpush2.bf16.msra.mxu0 %v1241
    %1689 = vmatprep.subr.bf16.mxu0 %v1238
    %1690 = vmatpush2.bf16.msra.mxu0 %v1237
    %1691 = vmatprep.subr.bf16.mxu0 %v1234
    %1692 = vmatpush2.bf16.msra.mxu0 %v1233
    %1693 = vmatprep.subr.bf16.mxu0 %v1230
    %1694 = vmatpush2.bf16.msra.mxu0 %v1229
    %1695 = vmatprep.mubr.bf16.mxu0 %v42
    %1696 = vmatmul.mubr.bf16.gmra.mxu0 %v41
    %v1697 = vpop.f32.mrf.mxu0
    %v1698 = vadd.f32 %v1657, %v1697
    %v1699 = vpop.f32.mrf.mxu0
    %v1700 = vadd.f32 %v1659, %v1699
    %v1701 = vpop.f32.mrf.mxu0
    %v1702 = vpop.f32.mrf.mxu0
    %1703 = vdwg.mxu0
    %1704 = vmatprep.subr.bf16.mxu0 %v1290
    %1705 = vmatpush1.bf16.msra.mxu0 %v1289
    %1706 = vmatprep.subr.bf16.mxu0 %v1286
    %1707 = vmatpush1.bf16.msra.mxu0 %v1285
    %1708 = vmatprep.subr.bf16.mxu0 %v1282
    %1709 = vmatpush1.bf16.msra.mxu0 %v1281
    %1710 = vmatprep.subr.bf16.mxu0 %v1278
    %1711 = vmatpush1.bf16.msra.mxu0 %v1277
    %1712 = vmatprep.subr.bf16.mxu0 %v1274
    %1713 = vmatpush1.bf16.msra.mxu0 %v1273
    %1714 = vmatprep.subr.bf16.mxu0 %v1270
    %1715 = vmatpush1.bf16.msra.mxu0 %v1269
    %1716 = vmatprep.subr.bf16.mxu0 %v1266
    %1717 = vmatpush1.bf16.msra.mxu0 %v1265
    %1718 = vmatprep.subr.bf16.mxu0 %v1262
    %1719 = vmatpush1.bf16.msra.mxu0 %v1261
    %1720 = vmatprep.subr.bf16.mxu0 %v1322
    %1721 = vmatpush2.bf16.msra.mxu0 %v1321
    %1722 = vmatprep.subr.bf16.mxu0 %v1318
    %1723 = vmatpush2.bf16.msra.mxu0 %v1317
    %1724 = vmatprep.subr.bf16.mxu0 %v1314
    %1725 = vmatpush2.bf16.msra.mxu0 %v1313
    %1726 = vmatprep.subr.bf16.mxu0 %v1310
    %1727 = vmatpush2.bf16.msra.mxu0 %v1309
    %1728 = vmatprep.subr.bf16.mxu0 %v1306
    %1729 = vmatpush2.bf16.msra.mxu0 %v1305
    %1730 = vmatprep.subr.bf16.mxu0 %v1302
    %1731 = vmatpush2.bf16.msra.mxu0 %v1301
    %1732 = vmatprep.subr.bf16.mxu0 %v1298
    %1733 = vmatpush2.bf16.msra.mxu0 %v1297
    %1734 = vmatprep.subr.bf16.mxu0 %v1294
    %1735 = vmatpush2.bf16.msra.mxu0 %v1293
    %1736 = vmatprep.mubr.bf16.mxu0 %v44
    %1737 = vmatmul.mubr.bf16.gmra.mxu0 %v43
    %v1738 = vpop.f32.mrf.mxu0
    %v1739 = vadd.f32 %v1698, %v1738
    %v1740 = vpop.f32.mrf.mxu0
    %v1741 = vadd.f32 %v1700, %v1740
    %v1742 = vpop.f32.mrf.mxu0
    %v1743 = vpop.f32.mrf.mxu0
    %1744 = vdwg.mxu0
    %1745 = vmatprep.subr.bf16.mxu0 %v1100
    %1746 = vmatpush1.bf16.msra.mxu0 %v1099
    %1747 = vmatprep.subr.bf16.mxu0 %v1096
    %1748 = vmatpush1.bf16.msra.mxu0 %v1095
    %1749 = vmatprep.subr.bf16.mxu0 %v1092
    %1750 = vmatpush1.bf16.msra.mxu0 %v1091
    %1751 = vmatprep.subr.bf16.mxu0 %v1088
    %1752 = vmatpush1.bf16.msra.mxu0 %v1087
    %1753 = vmatprep.subr.bf16.mxu0 %v1084
    %1754 = vmatpush1.bf16.msra.mxu0 %v1083
    %1755 = vmatprep.subr.bf16.mxu0 %v1080
    %1756 = vmatpush1.bf16.msra.mxu0 %v1079
    %1757 = vmatprep.subr.bf16.mxu0 %v1076
    %1758 = vmatpush1.bf16.msra.mxu0 %v1075
    %1759 = vmatprep.subr.bf16.mxu0 %v1072
    %1760 = vmatpush1.bf16.msra.mxu0 %v1071
    %1761 = vmatprep.subr.bf16.mxu0 %v1132
    %1762 = vmatpush2.bf16.msra.mxu0 %v1131
    %1763 = vmatprep.subr.bf16.mxu0 %v1128
    %1764 = vmatpush2.bf16.msra.mxu0 %v1127
    %1765 = vmatprep.subr.bf16.mxu0 %v1124
    %1766 = vmatpush2.bf16.msra.mxu0 %v1123
    %1767 = vmatprep.subr.bf16.mxu0 %v1120
    %1768 = vmatpush2.bf16.msra.mxu0 %v1119
    %1769 = vmatprep.subr.bf16.mxu0 %v1116
    %1770 = vmatpush2.bf16.msra.mxu0 %v1115
    %1771 = vmatprep.subr.bf16.mxu0 %v1112
    %1772 = vmatpush2.bf16.msra.mxu0 %v1111
    %1773 = vmatprep.subr.bf16.mxu0 %v1108
    %1774 = vmatpush2.bf16.msra.mxu0 %v1107
    %1775 = vmatprep.subr.bf16.mxu0 %v1104
    %1776 = vmatpush2.bf16.msra.mxu0 %v1103
    %1777 = vmatprep.mubr.bf16.mxu0 %v38
    %1778 = vmatmul.mubr.bf16.gmra.mxu0 %v37
    %v1779 = vpop.f32.mrf.mxu0
    %v1780 = vadd.f32 0.0, %v1779
    %v1781 = vpop.f32.mrf.mxu0
    %v1782 = vadd.f32 0.0, %v1781
    %v1783 = vpop.f32.mrf.mxu0
    %v1784 = vpop.f32.mrf.mxu0
    %1785 = vdwg.mxu0
    %1786 = vmatprep.subr.bf16.mxu0 %v1164
    %1787 = vmatpush1.bf16.msra.mxu0 %v1163
    %1788 = vmatprep.subr.bf16.mxu0 %v1160
    %1789 = vmatpush1.bf16.msra.mxu0 %v1159
    %1790 = vmatprep.subr.bf16.mxu0 %v1156
    %1791 = vmatpush1.bf16.msra.mxu0 %v1155
    %1792 = vmatprep.subr.bf16.mxu0 %v1152
    %1793 = vmatpush1.bf16.msra.mxu0 %v1151
    %1794 = vmatprep.subr.bf16.mxu0 %v1148
    %1795 = vmatpush1.bf16.msra.mxu0 %v1147
    %1796 = vmatprep.subr.bf16.mxu0 %v1144
    %1797 = vmatpush1.bf16.msra.mxu0 %v1143
    %1798 = vmatprep.subr.bf16.mxu0 %v1140
    %1799 = vmatpush1.bf16.msra.mxu0 %v1139
    %1800 = vmatprep.subr.bf16.mxu0 %v1136
    %1801 = vmatpush1.bf16.msra.mxu0 %v1135
    %1802 = vmatprep.subr.bf16.mxu0 %v1196
    %1803 = vmatpush2.bf16.msra.mxu0 %v1195
    %1804 = vmatprep.subr.bf16.mxu0 %v1192
    %1805 = vmatpush2.bf16.msra.mxu0 %v1191
    %1806 = vmatprep.subr.bf16.mxu0 %v1188
    %1807 = vmatpush2.bf16.msra.mxu0 %v1187
    %1808 = vmatprep.subr.bf16.mxu0 %v1184
    %1809 = vmatpush2.bf16.msra.mxu0 %v1183
    %1810 = vmatprep.subr.bf16.mxu0 %v1180
    %1811 = vmatpush2.bf16.msra.mxu0 %v1179
    %1812 = vmatprep.subr.bf16.mxu0 %v1176
    %1813 = vmatpush2.bf16.msra.mxu0 %v1175
    %1814 = vmatprep.subr.bf16.mxu0 %v1172
    %1815 = vmatpush2.bf16.msra.mxu0 %v1171
    %1816 = vmatprep.subr.bf16.mxu0 %v1168
    %1817 = vmatpush2.bf16.msra.mxu0 %v1167
    %1818 = vmatprep.mubr.bf16.mxu0 %v40
    %1819 = vmatmul.mubr.bf16.gmra.mxu0 %v39
    %v1820 = vpop.f32.mrf.mxu0
    %v1821 = vadd.f32 %v1780, %v1820
    %v1822 = vpop.f32.mrf.mxu0
    %v1823 = vadd.f32 %v1782, %v1822
    %v1824 = vpop.f32.mrf.mxu0
    %v1825 = vpop.f32.mrf.mxu0
    %1826 = vdwg.mxu0
    %1827 = vmatprep.subr.bf16.mxu0 %v1228
    %1828 = vmatpush1.bf16.msra.mxu0 %v1227
    %1829 = vmatprep.subr.bf16.mxu0 %v1224
    %1830 = vmatpush1.bf16.msra.mxu0 %v1223
    %1831 = vmatprep.subr.bf16.mxu0 %v1220
    %1832 = vmatpush1.bf16.msra.mxu0 %v1219
    %1833 = vmatprep.subr.bf16.mxu0 %v1216
    %1834 = vmatpush1.bf16.msra.mxu0 %v1215
    %1835 = vmatprep.subr.bf16.mxu0 %v1212
    %1836 = vmatpush1.bf16.msra.mxu0 %v1211
    %1837 = vmatprep.subr.bf16.mxu0 %v1208
    %1838 = vmatpush1.bf16.msra.mxu0 %v1207
    %1839 = vmatprep.subr.bf16.mxu0 %v1204
    %1840 = vmatpush1.bf16.msra.mxu0 %v1203
    %1841 = vmatprep.subr.bf16.mxu0 %v1200
    %1842 = vmatpush1.bf16.msra.mxu0 %v1199
    %1843 = vmatprep.subr.bf16.mxu0 %v1260
    %1844 = vmatpush2.bf16.msra.mxu0 %v1259
    %1845 = vmatprep.subr.bf16.mxu0 %v1256
    %1846 = vmatpush2.bf16.msra.mxu0 %v1255
    %1847 = vmatprep.subr.bf16.mxu0 %v1252
    %1848 = vmatpush2.bf16.msra.mxu0 %v1251
    %1849 = vmatprep.subr.bf16.mxu0 %v1248
    %1850 = vmatpush2.bf16.msra.mxu0 %v1247
    %1851 = vmatprep.subr.bf16.mxu0 %v1244
    %1852 = vmatpush2.bf16.msra.mxu0 %v1243
    %1853 = vmatprep.subr.bf16.mxu0 %v1240
    %1854 = vmatpush2.bf16.msra.mxu0 %v1239
    %1855 = vmatprep.subr.bf16.mxu0 %v1236
    %1856 = vmatpush2.bf16.msra.mxu0 %v1235
    %1857 = vmatprep.subr.bf16.mxu0 %v1232
    %1858 = vmatpush2.bf16.msra.mxu0 %v1231
    %1859 = vmatprep.mubr.bf16.mxu0 %v42
    %1860 = vmatmul.mubr.bf16.gmra.mxu0 %v41
    %v1861 = vpop.f32.mrf.mxu0
    %v1862 = vadd.f32 %v1821, %v1861
    %v1863 = vpop.f32.mrf.mxu0
    %v1864 = vadd.f32 %v1823, %v1863
    %v1865 = vpop.f32.mrf.mxu0
    %v1866 = vpop.f32.mrf.mxu0
    %1867 = vdwg.mxu0
    %1868 = vmatprep.subr.bf16.mxu0 %v1292
    %1869 = vmatpush1.bf16.msra.mxu0 %v1291
    %1870 = vmatprep.subr.bf16.mxu0 %v1288
    %1871 = vmatpush1.bf16.msra.mxu0 %v1287
    %1872 = vmatprep.subr.bf16.mxu0 %v1284
    %1873 = vmatpush1.bf16.msra.mxu0 %v1283
    %1874 = vmatprep.subr.bf16.mxu0 %v1280
    %1875 = vmatpush1.bf16.msra.mxu0 %v1279
    %1876 = vmatprep.subr.bf16.mxu0 %v1276
    %1877 = vmatpush1.bf16.msra.mxu0 %v1275
    %1878 = vmatprep.subr.bf16.mxu0 %v1272
    %1879 = vmatpush1.bf16.msra.mxu0 %v1271
    %1880 = vmatprep.subr.bf16.mxu0 %v1268
    %1881 = vmatpush1.bf16.msra.mxu0 %v1267
    %1882 = vmatprep.subr.bf16.mxu0 %v1264
    %1883 = vmatpush1.bf16.msra.mxu0 %v1263
    %1884 = vmatprep.subr.bf16.mxu0 %v1324
    %1885 = vmatpush2.bf16.msra.mxu0 %v1323
    %1886 = vmatprep.subr.bf16.mxu0 %v1320
    %1887 = vmatpush2.bf16.msra.mxu0 %v1319
    %1888 = vmatprep.subr.bf16.mxu0 %v1316
    %1889 = vmatpush2.bf16.msra.mxu0 %v1315
    %1890 = vmatprep.subr.bf16.mxu0 %v1312
    %1891 = vmatpush2.bf16.msra.mxu0 %v1311
    %1892 = vmatprep.subr.bf16.mxu0 %v1308
    %1893 = vmatpush2.bf16.msra.mxu0 %v1307
    %1894 = vmatprep.subr.bf16.mxu0 %v1304
    %1895 = vmatpush2.bf16.msra.mxu0 %v1303
    %1896 = vmatprep.subr.bf16.mxu0 %v1300
    %1897 = vmatpush2.bf16.msra.mxu0 %v1299
    %1898 = vmatprep.subr.bf16.mxu0 %v1296
    %1899 = vmatpush2.bf16.msra.mxu0 %v1295
    %1900 = vmatprep.mubr.bf16.mxu0 %v44
    %1901 = vmatmul.mubr.bf16.gmra.mxu0 %v43
    %v1902 = vpop.f32.mrf.mxu0
    %v1903 = vadd.f32 %v1862, %v1902
    %v1904 = vpop.f32.mrf.mxu0
    %v1905 = vadd.f32 %v1864, %v1904
    %v1906 = vpop.f32.mrf.mxu0
    %v1907 = vpop.f32.mrf.mxu0
    %1908 = vdwg.mxu0
    %v1909 = vld [vmem:[%s2] sm:$0xf]
    %v1911 = vlaneseq
    %v1912 = vshrl.u32 %v1911, 7
    %v1913 = vsub.s32 0, %v1912
    %v1914 = vrot.slane %v1909, %v1913
    %v1915 = vlaneseq
    %v1916 = vshrl.u32 %v1915, 7
    %v1917 = vsub.s32 1, %v1916
    %v1918 = vrot.slane %v1909, %v1917
    %v1919 = vlaneseq
    %v1920 = vshrl.u32 %v1919, 7
    %v1921 = vsub.s32 2, %v1920
    %v1922 = vrot.slane %v1909, %v1921
    %v1923 = vlaneseq
    %v1924 = vshrl.u32 %v1923, 7
    %v1925 = vsub.s32 3, %v1924
    %v1926 = vrot.slane %v1909, %v1925
    %v1931 = vadd.f32 %v1739, %v1914
    %v1932 = vadd.f32 %v1741, %v1918
    %v1933 = vadd.f32 %v1903, %v1922
    %v1934 = vadd.f32 %v1905, %v1926
    %1935 = vst [vmem:[#allocation5] sm:$0xff] %v1931
    %1936 = vst [vmem:[#allocation5 + $0x8] sm:$0xff] %v1932
    %1937 = vst [vmem:[#allocation5 + $0x10] sm:$0xff] %v1933
    %vm1938 = vcmask 949248
    %1939 = vst.msk [vmem:[#allocation5 + $0x18] sm:$0xff] %vm1938, %v1934
    // Predicated region
    $region18: #{small_model_forward.1} parent=1 // pred_check
      _
    $region19: #{small_model_forward.1} parent=1 // pred_check_branch
      %1941 = sbr.rel (0) target = $region21
    $region20: #{small_model_forward.1} parent=1 // pred_region
      %s1943 = ssub.s32 512, 512
      %1944 = vsyncadd [#allocation4], %s1943
      %s1946 = sshll.u32 [#allocation5], 4
      %s1947 = int_to_ptr.vmem [resolvable:$true] %s1946
      %1949 = dma.vmem_to_hbm [thread:$0]  %s1947, 512, %s3, [#allocation4]
    $region21: #{small_model_forward.1} parent=1 // pred_fallthru
      _
    // Predicated region
    $region22: #{small_model_forward.1} parent=1 // pred_check
      _
    $region23: #{small_model_forward.1} parent=1 // pred_check_branch
      %1951 = sbr.rel (0) target = $region25
    $region24: #{small_model_forward.1} parent=1 // pred_region
      %1952 = dma.done [#allocation4], 512
    $region25: #{small_model_forward.1} parent=1 // pred_fallthru
      _
    %1953 = vsyncpa [#allocation3], 1
    %1954 = vsyncpa [#allocation4], 1

</llo_original>
